<compile_context>
chip_gen: v6e
topology: v6e:2x2x1
jax: 0.10.0
libtpu: 0.0.40
codegen_flags: <defaults>
</compile_context>

<pallas_src>
import functools

import jax
import jax.numpy as jnp
import numpy as np
from jax.experimental import pallas as pl
from jax.experimental.pallas import tpu as pltpu

LN_EPS = 1e-5  # torch.nn.LayerNorm default


def _layer_norm(x, gamma, beta):
    # Single-pass LN: E[x] and E[x^2] are independent cross-lane reductions (they can
    # interleave in the XLU), var = E[x^2] - E[x]^2.
    mu = jnp.mean(x, axis=-1, keepdims=True)
    ms = jnp.mean(x * x, axis=-1, keepdims=True)
    var = jnp.maximum(ms - mu * mu, 0.0)
    return (x - mu) * jax.lax.rsqrt(var + LN_EPS) * gamma + beta


# ---------------------------------------------------------------------------
# Kernel body
# ---------------------------------------------------------------------------
def _kernel(F, upd_ref, inp_ref, w3_ref, wfc_ref, vec2f_ref, vecf_ref, vecco_ref,
            out_ref):
    f32, bf16 = jnp.float32, jnp.bfloat16

    # Packed weight rows:   w3 = [wd ; wi ; w_gates]            (3F, 2F) bf16
    # Packed vectors:       vec2f = [bd ; bi ; b_gates]         (3, 2F)  fp32
    #                       vecf  = [g_nin; b_nin; g_nout; b_nout;
    #                                g_inin; b_inin; g_inout; b_inout]  (8, F)
    #                       vecco = [g_fcn; b_fcn; bfc]         (3, Co)
    inp = inp_ref[...].astype(f32)                         # (TN, K, F)
    TN, K, _ = inp.shape
    R = TN * K

    # --- dynamic_layer; norm_out(param_out) taken immediately (short live range) ---
    params = jnp.dot(upd_ref[...].astype(bf16), w3_ref[0:F, :],
                     preferred_element_type=f32) + vec2f_ref[0:1, :]
    param_in = params[:, :F]                               # (TN, F)
    po = _layer_norm(params[:, F:], vecf_ref[2:3, :], vecf_ref[3:4, :])      # norm_out

    # --- input_layer on flattened rows; input_norm_out(input_out) immediately ---
    x2 = inp.reshape(R, F)                                 # fp32 reshape: free (K % 8 == 0)
    infeats = jnp.dot(x2.astype(bf16), w3_ref[F:2 * F, :],
                      preferred_element_type=f32) + vec2f_ref[1:2, :]
    io = _layer_norm(infeats[:, F:], vecf_ref[6:7, :], vecf_ref[7:8, :])     # input_norm_out

    # gate_feats = input_in * param_in.unsqueeze(-2)  (broadcast fuses into the mul)
    gate_feats = (infeats[:, :F].reshape(TN, K, F) * param_in[:, None, :]).reshape(R, F)
    # TODO(synk): gate_norm_act / activate_out optional branches omitted (module defaults: False).

    # --- fused input_gate || update_gate: one (R,F)@(F,2F) matmul fills the MXU ---
    gates = jnp.dot(gate_feats.astype(bf16), w3_ref[2 * F:3 * F, :],
                    preferred_element_type=f32) + vec2f_ref[2:3, :]
    ig = jax.nn.sigmoid(_layer_norm(gates[:, :F], vecf_ref[4:5, :], vecf_ref[5:6, :]))  # input_norm_in
    ug = jax.nn.sigmoid(_layer_norm(gates[:, F:], vecf_ref[0:1, :], vecf_ref[1:2, :]))  # norm_in

    # features = update_gate * param_out.unsqueeze(-2) + input_gate * input_out
    feats = (ug.reshape(TN, K, F) * po[:, None, :]).reshape(R, F) + ig * io

    # --- fc_layer + fc_norm + ReLU ---
    y = jnp.dot(feats.astype(bf16), wfc_ref[...],
                preferred_element_type=f32) + vecco_ref[2:3, :]
    y = _layer_norm(y, vecco_ref[0:1, :], vecco_ref[1:2, :])
    out_ref[...] = jnp.maximum(y, 0.0).reshape(out_ref.shape)


# ---------------------------------------------------------------------------
# Host-side helpers
# ---------------------------------------------------------------------------
def _is_v7x():
    try:
        kind = jax.devices()[0].device_kind.lower()
    except Exception:
        return False
    return "v7" in kind


def _choose_tile_n(N, K, *, is_v7x):
    """Pick tile_n (a divisor of N, multiple of 8 or == N) per generation:
       - single TC (v5e/v6e): one step for small problems; otherwise the tallest tile
         within the rows/step cap (amortizes ~0.35us/step, fills the MXU rows).
       - v7x (2 TCs, 64 MiB VMEM): >=4 steps (>=2 per core) when there is enough work
         so DMA/compute double-buffering overlaps; rows/step capped at 1024."""
    total = N * K
    max_rows = 1024 if is_v7x else 2048
    if is_v7x:
        min_steps = 4 if total > 4 * 256 else (2 if total > 256 else 1)
    else:
        min_steps = 2 if total > max_rows else 1
    divs = [d for d in range(1, N + 1) if N % d == 0 and (d % 8 == 0 or d == N)]
    feas = [d for d in divs if d * K <= max_rows] or [min(divs)]
    pref = [d for d in feas if N // d >= min_steps] or feas
    return max(pref)


def prepare_params(params):
    """One-time host-side packing (call at parameter-load time, NOT per forward):
    fuses the two gate Linears, stacks the three (C,2F) weights into one bf16 (3F,2F)
    array, keeps the fc weight as bf16 (F,Co), and collapses the 14 (1,dim) bias /
    LayerNorm vectors into 3 packed fp32 arrays."""
    C, twoF = params["wd"].shape
    F = twoF // 2
    # K-Net configs instantiate KernelUpdator with in_channels == feat_channels
    # (the PyTorch forward only type-checks in that case).
    assert C == F, "KernelUpdator requires in_channels == feat_channels"
    w_gates = jnp.concatenate([params["wig"], params["wug"]], axis=1)            # (F, 2F)
    b_gates = jnp.concatenate([params["big"], params["bug"]], axis=1)            # (1, 2F)
    w3 = jnp.concatenate([params["wd"], params["wi"], w_gates], axis=0).astype(jnp.bfloat16)
    wfc = params["wfc"].astype(jnp.bfloat16)                                     # (F, Co)
    vec2f = jnp.concatenate([params["bd"], params["bi"], b_gates], axis=0).astype(jnp.float32)
    vecf = jnp.concatenate(
        [params[k] for k in ("g_nin", "b_nin", "g_nout", "b_nout",
                             "g_inin", "b_inin", "g_inout", "b_inout")],
        axis=0).astype(jnp.float32)                                              # (8, F)
    vecco = jnp.concatenate([params["g_fcn"], params["b_fcn"], params["bfc"]],
                            axis=0).astype(jnp.float32)                          # (3, Co)
    return {"w3": w3, "wfc": wfc, "vec2f": vec2f, "vecf": vecf, "vecco": vecco}


def kernel_updator(update_feature, input_feature, prepped, *, tile_n=None):
    """Pallas implementation of KernelUpdator.forward (use prepare_params() once)."""
    N, C = update_feature.shape
    N2, K, F = input_feature.shape
    assert N2 == N and C == F
    w3, wfc = prepped["w3"], prepped["wfc"]
    vec2f, vecf, vecco = prepped["vec2f"], prepped["vecf"], prepped["vecco"]
    assert w3.shape == (3 * F, 2 * F)
    Co = wfc.shape[1]

    # Keep K a multiple of the fp32 sublane count so in-kernel reshapes are views.
    pad_k = (-K) % 8
    if pad_k:
        input_feature = jnp.pad(input_feature, ((0, 0), (0, pad_k), (0, 0)))
    Kp = K + pad_k

    is_v7x = _is_v7x()
    if tile_n is None:
        tile_n = _choose_tile_n(N, Kp, is_v7x=is_v7x)
    assert N % tile_n == 0 and (tile_n % 8 == 0 or tile_n == N)
    grid = (N // tile_n,)

    rows = N * Kp
    flops = (2 * N * C * 2 * F            # dynamic_layer
             + 2 * rows * F * 2 * F * 2   # input_layer + fused gates
             + 2 * rows * F * Co)         # fc_layer
    transcendentals = 2 * rows * F + 5 * rows
    bytes_accessed = (4 * (N * C + rows * F + rows * Co)
                      + 2 * (int(w3.size) + int(wfc.size))
                      + 4 * (int(vec2f.size) + int(vecf.size) + int(vecco.size)))
    cost = pl.CostEstimate(flops=flops, transcendentals=transcendentals,
                           bytes_accessed=bytes_accessed)

    def const_spec(arr):  # grid-invariant full-array block
        return pl.BlockSpec(arr.shape, lambda i: (0, 0))

    in_specs = [
        pl.BlockSpec((tile_n, C), lambda i: (i, 0)),
        pl.BlockSpec((tile_n, Kp, F), lambda i: (i, 0, 0)),
        const_spec(w3), const_spec(wfc),
        const_spec(vec2f), const_spec(vecf), const_spec(vecco),
    ]
    out_spec = pl.BlockSpec((tile_n, Kp, Co), lambda i: (i, 0, 0))

    out = pl.pallas_call(
        functools.partial(_kernel, F),
        out_shape=jax.ShapeDtypeStruct((N, Kp, Co), jnp.float32),
        grid=grid,
        in_specs=in_specs,
        out_specs=out_spec,
        cost_estimate=cost,
        compiler_params=pltpu.CompilerParams(
            dimension_semantics=("parallel",),
            vmem_limit_bytes=(40 << 20) if is_v7x else (64 << 20)),
    )(update_feature, input_feature, w3, wfc, vec2f, vecf, vecco)

    if pad_k:
        out = out[:, :K, :]
    return out


# ---------------------------------------------------------------------------
# Pure-JAX reference (mirrors the PyTorch forward, fp32 weights)
# ---------------------------------------------------------------------------
def kernel_updator_ref(upd, inp, p):
    F = p["wd"].shape[1] // 2
    parameters = jnp.dot(upd, p["wd"]) + p["bd"][0]
    param_in, param_out = parameters[:, :F], parameters[:, F:]
    infeats = jnp.dot(inp, p["wi"]) + p["bi"][0]
    input_in, input_out = infeats[..., :F], infeats[..., F:]
    gate_feats = input_in * param_in[:, None, :]
    ig = jax.nn.sigmoid(_layer_norm(
        jnp.dot(gate_feats, p["wig"]) + p["big"][0], p["g_inin"][0], p["b_inin"][0]))
    ug = jax.nn.sigmoid(_layer_norm(
        jnp.dot(gate_feats, p["wug"]) + p["bug"][0], p["g_nin"][0], p["b_nin"][0]))
    po = _layer_norm(param_out, p["g_nout"][0], p["b_nout"][0])
    io = _layer_norm(input_out, p["g_inout"][0], p["b_inout"][0])
    feats = ug * po[:, None, :] + ig * io
    y = jnp.dot(feats, p["wfc"]) + p["bfc"][0]
    y = _layer_norm(y, p["g_fcn"][0], p["b_fcn"][0])
    return jnp.maximum(y, 0.0)


def init_params(key, in_channels, feat_channels, out_channels):
    """Deterministic synthetic params. Linear weights stored as (in, out)."""
    C, F, Co = in_channels, feat_channels, out_channels
    ks = jax.random.split(key, 16)
    s = 0.05

    def w(k, shape):
        return (s * jax.random.normal(k, shape)).astype(jnp.float32)

    p = {
        "wd":  w(ks[0], (C, 2 * F)), "bd":  w(ks[1], (1, 2 * F)),
        "wi":  w(ks[2], (C, 2 * F)), "bi":  w(ks[3], (1, 2 * F)),
        "wig": w(ks[4], (C, F)),     "big": w(ks[5], (1, F)),
        "wug": w(ks[6], (C, F)),     "bug": w(ks[7], (1, F)),
        "wfc": w(ks[8], (F, Co)),    "bfc": w(ks[9], (1, Co)),
    }
    ln_keys = jax.random.split(ks[10], 10)
    for i, (g, b, dim) in enumerate([("g_nin", "b_nin", F), ("g_nout", "b_nout", F),
                                     ("g_inin", "b_inin", F), ("g_inout", "b_inout", F),
                                     ("g_fcn", "b_fcn", Co)]):
        p[g] = (1.0 + 0.1 * jax.random.normal(ln_keys[2 * i], (1, dim))).astype(jnp.float32)
        p[b] = (0.1 * jax.random.normal(ln_keys[2 * i + 1], (1, dim))).astype(jnp.float32)
    return p


if __name__ == "__main__":
    # Small, self-consistent sizes: in_channels == feat_channels (as in K-Net configs).
    IN_CHANNELS = 128
    FEAT_CHANNELS = 128
    OUT_CHANNELS = 128          # out_channels=None -> in_channels
    N_PROPOSALS = 16            # e.g. batch=2 * num_proposals=8, flattened
    K_POSITIONS = 8             # input_feature reshaped to (N, K, feat_channels)

    key = jax.random.PRNGKey(0)
    k_upd, k_inp, k_par = jax.random.split(key, 3)

    update_feature = jax.random.normal(
        k_upd, (N_PROPOSALS, IN_CHANNELS), dtype=jnp.float32)
    input_feature = jax.random.normal(
        k_inp, (N_PROPOSALS, K_POSITIONS, FEAT_CHANNELS), dtype=jnp.float32)
    params = init_params(k_par, IN_CHANNELS, FEAT_CHANNELS, OUT_CHANNELS)

    prepped = prepare_params(params)        # one-time packing / bf16 cast
    fwd = jax.jit(kernel_updator)

    out = jax.block_until_ready(fwd(update_feature, input_feature, prepped))
    ref = jax.block_until_ready(kernel_updator_ref(update_feature, input_feature, params))

    assert out.shape == (N_PROPOSALS, K_POSITIONS, OUT_CHANNELS)
    # Kernel stores weights in bf16 and runs single-pass bf16 MXU matmuls (fp32 accum),
    # so it differs from the fp32 reference at the bf16-rounding level -> loose tol.
    # TODO(synk): for exact fp32 parity with the PyTorch module, keep fp32 weights and
    # raise matmul precision to HIGHEST (cheap: the kernel is memory-bound).
    np.testing.assert_allclose(np.asarray(out), np.asarray(ref), rtol=3e-2, atol=3e-2)
    print("KERNEL_OK")
</pallas_src>

<mosaic_0001>
module attributes {stable_mosaic.version = 11 : i64} {
  func.func @_kernel(%arg0: i32, %arg1: memref<16x128xf32, #tpu.memory_space<vmem>>, %arg2: memref<16x8x128xf32, #tpu.memory_space<vmem>>, %arg3: memref<384x256xbf16, #tpu.memory_space<vmem>>, %arg4: memref<128x128xbf16, #tpu.memory_space<vmem>>, %arg5: memref<3x256xf32, #tpu.memory_space<vmem>>, %arg6: memref<8x128xf32, #tpu.memory_space<vmem>>, %arg7: memref<3x128xf32, #tpu.memory_space<vmem>>, %arg8: memref<16x8x128xf32, #tpu.memory_space<vmem>>) attributes {dimension_semantics = [#tpu.dimension_semantics<parallel>], iteration_bounds = array<i64: 1>, scalar_prefetch = 0 : i64, scratch_operands = 0 : i64, tpu.core_type = #tpu.core_type<tc>, window_params = [{transform_indices = @transform_0, window_bounds = array<i64: 16, 128>}, {transform_indices = @transform_1, window_bounds = array<i64: 16, 8, 128>}, {pipeline_mode = #tpu.pipeline_mode<synchronous>, transform_indices = @transform_2, window_bounds = array<i64: 384, 256>}, {pipeline_mode = #tpu.pipeline_mode<synchronous>, transform_indices = @transform_3, window_bounds = array<i64: 128, 128>}, {pipeline_mode = #tpu.pipeline_mode<synchronous>, transform_indices = @transform_4, window_bounds = array<i64: 3, 256>}, {pipeline_mode = #tpu.pipeline_mode<synchronous>, transform_indices = @transform_5, window_bounds = array<i64: 8, 128>}, {pipeline_mode = #tpu.pipeline_mode<synchronous>, transform_indices = @transform_6, window_bounds = array<i64: 3, 128>}, {transform_indices = @transform_7, window_bounds = array<i64: 16, 8, 128>}]} {
    %c0 = arith.constant 0 : index
    %c0_0 = arith.constant 0 : index
    %c0_1 = arith.constant 0 : index
    %0 = vector.load %arg2[%c0, %c0_0, %c0_1] : memref<16x8x128xf32, #tpu.memory_space<vmem>>, vector<16x8x128xf32>
    %c0_2 = arith.constant 0 : index
    %c0_3 = arith.constant 0 : index
    %1 = vector.load %arg1[%c0_2, %c0_3] : memref<16x128xf32, #tpu.memory_space<vmem>>, vector<16x128xf32>
    %2 = arith.truncf %1 : vector<16x128xf32> to vector<16x128xbf16>
    %c0_4 = arith.constant 0 : index
    %c0_5 = arith.constant 0 : index
    %3 = vector.load %arg3[%c0_4, %c0_5] : memref<384x256xbf16, #tpu.memory_space<vmem>>, vector<128x256xbf16>
    %cst = arith.constant dense<0.000000e+00> : vector<16x256xf32>
    %4 = tpu.matmul %2, %3, %cst {dimension_numbers = #tpu.dot_dimension_numbers<[1], [0], [0], [1], [0, 0, 1, 1], [], []>} : vector<16x128xbf16>, vector<128x256xbf16>, vector<16x256xf32> -> vector<16x256xf32>
    %c0_6 = arith.constant 0 : index
    %c0_7 = arith.constant 0 : index
    %5 = vector.load %arg5[%c0_6, %c0_7] : memref<3x256xf32, #tpu.memory_space<vmem>>, vector<1x256xf32>
    %6 = vector.broadcast %5 : vector<1x256xf32> to vector<16x256xf32>
    %7 = arith.addf %4, %6 : vector<16x256xf32>
    %8 = vector.extract_strided_slice %7 {offsets = [0, 0], sizes = [16, 128], strides = [1, 1]} : vector<16x256xf32> to vector<16x128xf32>
    %9 = vector.extract_strided_slice %7 {offsets = [0, 128], sizes = [16, 128], strides = [1, 1]} : vector<16x256xf32> to vector<16x128xf32>
    %c2 = arith.constant 2 : index
    %c0_8 = arith.constant 0 : index
    %10 = vector.load %arg6[%c2, %c0_8] : memref<8x128xf32, #tpu.memory_space<vmem>>, vector<1x128xf32>
    %c3 = arith.constant 3 : index
    %c0_9 = arith.constant 0 : index
    %11 = vector.load %arg6[%c3, %c0_9] : memref<8x128xf32, #tpu.memory_space<vmem>>, vector<1x128xf32>
    %cst_10 = arith.constant dense<0.000000e+00> : vector<16xf32>
    %12 = vector.multi_reduction <add>, %9, %cst_10 [1] : vector<16x128xf32> to vector<16xf32>
    %13 = vector.shape_cast %12 : vector<16xf32> to vector<16x1xf32>
    %cst_11 = arith.constant 1.280000e+02 : f32
    %14 = vector.broadcast %cst_11 : f32 to vector<16x1xf32>
    %15 = arith.divf %13, %14 : vector<16x1xf32>
    %16 = arith.mulf %9, %9 : vector<16x128xf32>
    %cst_12 = arith.constant dense<0.000000e+00> : vector<16xf32>
    %17 = vector.multi_reduction <add>, %16, %cst_12 [1] : vector<16x128xf32> to vector<16xf32>
    %18 = vector.shape_cast %17 : vector<16xf32> to vector<16x1xf32>
    %cst_13 = arith.constant 1.280000e+02 : f32
    %19 = vector.broadcast %cst_13 : f32 to vector<16x1xf32>
    %20 = arith.divf %18, %19 : vector<16x1xf32>
    %21 = arith.mulf %15, %15 : vector<16x1xf32>
    %22 = arith.subf %20, %21 : vector<16x1xf32>
    %cst_14 = arith.constant 0.000000e+00 : f32
    %23 = vector.broadcast %cst_14 : f32 to vector<16x1xf32>
    %24 = arith.maximumf %22, %23 : vector<16x1xf32>
    %25 = vector.broadcast %15 : vector<16x1xf32> to vector<16x128xf32>
    %26 = arith.subf %9, %25 : vector<16x128xf32>
    %cst_15 = arith.constant 9.99999974E-6 : f32
    %27 = vector.broadcast %cst_15 : f32 to vector<16x1xf32>
    %28 = arith.addf %24, %27 : vector<16x1xf32>
    %29 = math.rsqrt %28 : vector<16x1xf32>
    %30 = vector.broadcast %29 : vector<16x1xf32> to vector<16x128xf32>
    %31 = arith.mulf %26, %30 : vector<16x128xf32>
    %32 = vector.broadcast %10 : vector<1x128xf32> to vector<16x128xf32>
    %33 = arith.mulf %31, %32 : vector<16x128xf32>
    %34 = vector.broadcast %11 : vector<1x128xf32> to vector<16x128xf32>
    %35 = arith.addf %33, %34 : vector<16x128xf32>
    %36 = vector.shape_cast %0 : vector<16x8x128xf32> to vector<128x128xf32>
    %37 = arith.truncf %36 : vector<128x128xf32> to vector<128x128xbf16>
    %c128 = arith.constant 128 : index
    %c0_16 = arith.constant 0 : index
    %38 = vector.load %arg3[%c128, %c0_16] : memref<384x256xbf16, #tpu.memory_space<vmem>>, vector<128x256xbf16>
    %cst_17 = arith.constant dense<0.000000e+00> : vector<128x256xf32>
    %39 = tpu.matmul %37, %38, %cst_17 {dimension_numbers = #tpu.dot_dimension_numbers<[1], [0], [0], [1], [0, 0, 1, 1], [], []>} : vector<128x128xbf16>, vector<128x256xbf16>, vector<128x256xf32> -> vector<128x256xf32>
    %c1 = arith.constant 1 : index
    %c0_18 = arith.constant 0 : index
    %40 = vector.load %arg5[%c1, %c0_18] : memref<3x256xf32, #tpu.memory_space<vmem>>, vector<1x256xf32>
    %41 = vector.broadcast %40 : vector<1x256xf32> to vector<128x256xf32>
    %42 = arith.addf %39, %41 : vector<128x256xf32>
    %43 = vector.extract_strided_slice %42 {offsets = [0, 128], sizes = [128, 128], strides = [1, 1]} : vector<128x256xf32> to vector<128x128xf32>
    %c6 = arith.constant 6 : index
    %c0_19 = arith.constant 0 : index
    %44 = vector.load %arg6[%c6, %c0_19] : memref<8x128xf32, #tpu.memory_space<vmem>>, vector<1x128xf32>
    %c7 = arith.constant 7 : index
    %c0_20 = arith.constant 0 : index
    %45 = vector.load %arg6[%c7, %c0_20] : memref<8x128xf32, #tpu.memory_space<vmem>>, vector<1x128xf32>
    %cst_21 = arith.constant dense<0.000000e+00> : vector<128xf32>
    %46 = vector.multi_reduction <add>, %43, %cst_21 [1] : vector<128x128xf32> to vector<128xf32>
    %47 = vector.shape_cast %46 : vector<128xf32> to vector<128x1xf32>
    %cst_22 = arith.constant 1.280000e+02 : f32
    %48 = vector.broadcast %cst_22 : f32 to vector<128x1xf32>
    %49 = arith.divf %47, %48 : vector<128x1xf32>
    %50 = arith.mulf %43, %43 : vector<128x128xf32>
    %cst_23 = arith.constant dense<0.000000e+00> : vector<128xf32>
    %51 = vector.multi_reduction <add>, %50, %cst_23 [1] : vector<128x128xf32> to vector<128xf32>
    %52 = vector.shape_cast %51 : vector<128xf32> to vector<128x1xf32>
    %cst_24 = arith.constant 1.280000e+02 : f32
    %53 = vector.broadcast %cst_24 : f32 to vector<128x1xf32>
    %54 = arith.divf %52, %53 : vector<128x1xf32>
    %55 = arith.mulf %49, %49 : vector<128x1xf32>
    %56 = arith.subf %54, %55 : vector<128x1xf32>
    %cst_25 = arith.constant 0.000000e+00 : f32
    %57 = vector.broadcast %cst_25 : f32 to vector<128x1xf32>
    %58 = arith.maximumf %56, %57 : vector<128x1xf32>
    %59 = vector.broadcast %49 : vector<128x1xf32> to vector<128x128xf32>
    %60 = arith.subf %43, %59 : vector<128x128xf32>
    %cst_26 = arith.constant 9.99999974E-6 : f32
    %61 = vector.broadcast %cst_26 : f32 to vector<128x1xf32>
    %62 = arith.addf %58, %61 : vector<128x1xf32>
    %63 = math.rsqrt %62 : vector<128x1xf32>
    %64 = vector.broadcast %63 : vector<128x1xf32> to vector<128x128xf32>
    %65 = arith.mulf %60, %64 : vector<128x128xf32>
    %66 = vector.broadcast %44 : vector<1x128xf32> to vector<128x128xf32>
    %67 = arith.mulf %65, %66 : vector<128x128xf32>
    %68 = vector.broadcast %45 : vector<1x128xf32> to vector<128x128xf32>
    %69 = arith.addf %67, %68 : vector<128x128xf32>
    %70 = vector.extract_strided_slice %42 {offsets = [0, 0], sizes = [128, 128], strides = [1, 1]} : vector<128x256xf32> to vector<128x128xf32>
    %71 = vector.shape_cast %70 : vector<128x128xf32> to vector<16x8x128xf32>
    %72 = vector.shape_cast %8 : vector<16x128xf32> to vector<16x1x128xf32>
    %73 = vector.broadcast %72 : vector<16x1x128xf32> to vector<16x8x128xf32>
    %74 = arith.mulf %71, %73 : vector<16x8x128xf32>
    %75 = vector.shape_cast %74 : vector<16x8x128xf32> to vector<128x128xf32>
    %76 = arith.truncf %75 : vector<128x128xf32> to vector<128x128xbf16>
    %c256 = arith.constant 256 : index
    %c0_27 = arith.constant 0 : index
    %77 = vector.load %arg3[%c256, %c0_27] : memref<384x256xbf16, #tpu.memory_space<vmem>>, vector<128x256xbf16>
    %cst_28 = arith.constant dense<0.000000e+00> : vector<128x256xf32>
    %78 = tpu.matmul %76, %77, %cst_28 {dimension_numbers = #tpu.dot_dimension_numbers<[1], [0], [0], [1], [0, 0, 1, 1], [], []>} : vector<128x128xbf16>, vector<128x256xbf16>, vector<128x256xf32> -> vector<128x256xf32>
    %c2_29 = arith.constant 2 : index
    %c0_30 = arith.constant 0 : index
    %79 = vector.load %arg5[%c2_29, %c0_30] : memref<3x256xf32, #tpu.memory_space<vmem>>, vector<1x256xf32>
    %80 = vector.broadcast %79 : vector<1x256xf32> to vector<128x256xf32>
    %81 = arith.addf %78, %80 : vector<128x256xf32>
    %82 = vector.extract_strided_slice %81 {offsets = [0, 0], sizes = [128, 128], strides = [1, 1]} : vector<128x256xf32> to vector<128x128xf32>
    %c4 = arith.constant 4 : index
    %c0_31 = arith.constant 0 : index
    %83 = vector.load %arg6[%c4, %c0_31] : memref<8x128xf32, #tpu.memory_space<vmem>>, vector<1x128xf32>
    %c5 = arith.constant 5 : index
    %c0_32 = arith.constant 0 : index
    %84 = vector.load %arg6[%c5, %c0_32] : memref<8x128xf32, #tpu.memory_space<vmem>>, vector<1x128xf32>
    %cst_33 = arith.constant dense<0.000000e+00> : vector<128xf32>
    %85 = vector.multi_reduction <add>, %82, %cst_33 [1] : vector<128x128xf32> to vector<128xf32>
    %86 = vector.shape_cast %85 : vector<128xf32> to vector<128x1xf32>
    %cst_34 = arith.constant 1.280000e+02 : f32
    %87 = vector.broadcast %cst_34 : f32 to vector<128x1xf32>
    %88 = arith.divf %86, %87 : vector<128x1xf32>
    %89 = arith.mulf %82, %82 : vector<128x128xf32>
    %cst_35 = arith.constant dense<0.000000e+00> : vector<128xf32>
    %90 = vector.multi_reduction <add>, %89, %cst_35 [1] : vector<128x128xf32> to vector<128xf32>
    %91 = vector.shape_cast %90 : vector<128xf32> to vector<128x1xf32>
    %cst_36 = arith.constant 1.280000e+02 : f32
    %92 = vector.broadcast %cst_36 : f32 to vector<128x1xf32>
    %93 = arith.divf %91, %92 : vector<128x1xf32>
    %94 = arith.mulf %88, %88 : vector<128x1xf32>
    %95 = arith.subf %93, %94 : vector<128x1xf32>
    %cst_37 = arith.constant 0.000000e+00 : f32
    %96 = vector.broadcast %cst_37 : f32 to vector<128x1xf32>
    %97 = arith.maximumf %95, %96 : vector<128x1xf32>
    %98 = vector.broadcast %88 : vector<128x1xf32> to vector<128x128xf32>
    %99 = arith.subf %82, %98 : vector<128x128xf32>
    %cst_38 = arith.constant 9.99999974E-6 : f32
    %100 = vector.broadcast %cst_38 : f32 to vector<128x1xf32>
    %101 = arith.addf %97, %100 : vector<128x1xf32>
    %102 = math.rsqrt %101 : vector<128x1xf32>
    %103 = vector.broadcast %102 : vector<128x1xf32> to vector<128x128xf32>
    %104 = arith.mulf %99, %103 : vector<128x128xf32>
    %105 = vector.broadcast %83 : vector<1x128xf32> to vector<128x128xf32>
    %106 = arith.mulf %104, %105 : vector<128x128xf32>
    %107 = vector.broadcast %84 : vector<1x128xf32> to vector<128x128xf32>
    %108 = arith.addf %106, %107 : vector<128x128xf32>
    %109 = arith.negf %108 : vector<128x128xf32>
    %110 = math.exp %109 : vector<128x128xf32>
    %cst_39 = arith.constant 1.000000e+00 : f32
    %111 = vector.broadcast %cst_39 : f32 to vector<128x128xf32>
    %112 = arith.addf %111, %110 : vector<128x128xf32>
    %113 = arith.divf %111, %112 : vector<128x128xf32>
    %114 = vector.extract_strided_slice %81 {offsets = [0, 128], sizes = [128, 128], strides = [1, 1]} : vector<128x256xf32> to vector<128x128xf32>
    %c0_40 = arith.constant 0 : index
    %c0_41 = arith.constant 0 : index
    %115 = vector.load %arg6[%c0_40, %c0_41] : memref<8x128xf32, #tpu.memory_space<vmem>>, vector<1x128xf32>
    %c1_42 = arith.constant 1 : index
    %c0_43 = arith.constant 0 : index
    %116 = vector.load %arg6[%c1_42, %c0_43] : memref<8x128xf32, #tpu.memory_space<vmem>>, vector<1x128xf32>
    %cst_44 = arith.constant dense<0.000000e+00> : vector<128xf32>
    %117 = vector.multi_reduction <add>, %114, %cst_44 [1] : vector<128x128xf32> to vector<128xf32>
    %118 = vector.shape_cast %117 : vector<128xf32> to vector<128x1xf32>
    %cst_45 = arith.constant 1.280000e+02 : f32
    %119 = vector.broadcast %cst_45 : f32 to vector<128x1xf32>
    %120 = arith.divf %118, %119 : vector<128x1xf32>
    %121 = arith.mulf %114, %114 : vector<128x128xf32>
    %cst_46 = arith.constant dense<0.000000e+00> : vector<128xf32>
    %122 = vector.multi_reduction <add>, %121, %cst_46 [1] : vector<128x128xf32> to vector<128xf32>
    %123 = vector.shape_cast %122 : vector<128xf32> to vector<128x1xf32>
    %cst_47 = arith.constant 1.280000e+02 : f32
    %124 = vector.broadcast %cst_47 : f32 to vector<128x1xf32>
    %125 = arith.divf %123, %124 : vector<128x1xf32>
    %126 = arith.mulf %120, %120 : vector<128x1xf32>
    %127 = arith.subf %125, %126 : vector<128x1xf32>
    %cst_48 = arith.constant 0.000000e+00 : f32
    %128 = vector.broadcast %cst_48 : f32 to vector<128x1xf32>
    %129 = arith.maximumf %127, %128 : vector<128x1xf32>
    %130 = vector.broadcast %120 : vector<128x1xf32> to vector<128x128xf32>
    %131 = arith.subf %114, %130 : vector<128x128xf32>
    %cst_49 = arith.constant 9.99999974E-6 : f32
    %132 = vector.broadcast %cst_49 : f32 to vector<128x1xf32>
    %133 = arith.addf %129, %132 : vector<128x1xf32>
    %134 = math.rsqrt %133 : vector<128x1xf32>
    %135 = vector.broadcast %134 : vector<128x1xf32> to vector<128x128xf32>
    %136 = arith.mulf %131, %135 : vector<128x128xf32>
    %137 = vector.broadcast %115 : vector<1x128xf32> to vector<128x128xf32>
    %138 = arith.mulf %136, %137 : vector<128x128xf32>
    %139 = vector.broadcast %116 : vector<1x128xf32> to vector<128x128xf32>
    %140 = arith.addf %138, %139 : vector<128x128xf32>
    %141 = arith.negf %140 : vector<128x128xf32>
    %142 = math.exp %141 : vector<128x128xf32>
    %cst_50 = arith.constant 1.000000e+00 : f32
    %143 = vector.broadcast %cst_50 : f32 to vector<128x128xf32>
    %144 = arith.addf %143, %142 : vector<128x128xf32>
    %145 = arith.divf %143, %144 : vector<128x128xf32>
    %146 = vector.shape_cast %145 : vector<128x128xf32> to vector<16x8x128xf32>
    %147 = vector.shape_cast %35 : vector<16x128xf32> to vector<16x1x128xf32>
    %148 = vector.broadcast %147 : vector<16x1x128xf32> to vector<16x8x128xf32>
    %149 = arith.mulf %146, %148 : vector<16x8x128xf32>
    %150 = vector.shape_cast %149 : vector<16x8x128xf32> to vector<128x128xf32>
    %151 = arith.mulf %113, %69 : vector<128x128xf32>
    %152 = arith.addf %150, %151 : vector<128x128xf32>
    %153 = arith.truncf %152 : vector<128x128xf32> to vector<128x128xbf16>
    %c0_51 = arith.constant 0 : index
    %c0_52 = arith.constant 0 : index
    %154 = vector.load %arg4[%c0_51, %c0_52] : memref<128x128xbf16, #tpu.memory_space<vmem>>, vector<128x128xbf16>
    %cst_53 = arith.constant dense<0.000000e+00> : vector<128x128xf32>
    %155 = tpu.matmul %153, %154, %cst_53 {dimension_numbers = #tpu.dot_dimension_numbers<[1], [0], [0], [1], [0, 0, 1, 1], [], []>} : vector<128x128xbf16>, vector<128x128xbf16>, vector<128x128xf32> -> vector<128x128xf32>
    %c2_54 = arith.constant 2 : index
    %c0_55 = arith.constant 0 : index
    %156 = vector.load %arg7[%c2_54, %c0_55] : memref<3x128xf32, #tpu.memory_space<vmem>>, vector<1x128xf32>
    %157 = vector.broadcast %156 : vector<1x128xf32> to vector<128x128xf32>
    %158 = arith.addf %155, %157 : vector<128x128xf32>
    %c0_56 = arith.constant 0 : index
    %c0_57 = arith.constant 0 : index
    %159 = vector.load %arg7[%c0_56, %c0_57] : memref<3x128xf32, #tpu.memory_space<vmem>>, vector<1x128xf32>
    %c1_58 = arith.constant 1 : index
    %c0_59 = arith.constant 0 : index
    %160 = vector.load %arg7[%c1_58, %c0_59] : memref<3x128xf32, #tpu.memory_space<vmem>>, vector<1x128xf32>
    %cst_60 = arith.constant dense<0.000000e+00> : vector<128xf32>
    %161 = vector.multi_reduction <add>, %158, %cst_60 [1] : vector<128x128xf32> to vector<128xf32>
    %162 = vector.shape_cast %161 : vector<128xf32> to vector<128x1xf32>
    %cst_61 = arith.constant 1.280000e+02 : f32
    %163 = vector.broadcast %cst_61 : f32 to vector<128x1xf32>
    %164 = arith.divf %162, %163 : vector<128x1xf32>
    %165 = arith.mulf %158, %158 : vector<128x128xf32>
    %cst_62 = arith.constant dense<0.000000e+00> : vector<128xf32>
    %166 = vector.multi_reduction <add>, %165, %cst_62 [1] : vector<128x128xf32> to vector<128xf32>
    %167 = vector.shape_cast %166 : vector<128xf32> to vector<128x1xf32>
    %cst_63 = arith.constant 1.280000e+02 : f32
    %168 = vector.broadcast %cst_63 : f32 to vector<128x1xf32>
    %169 = arith.divf %167, %168 : vector<128x1xf32>
    %170 = arith.mulf %164, %164 : vector<128x1xf32>
    %171 = arith.subf %169, %170 : vector<128x1xf32>
    %cst_64 = arith.constant 0.000000e+00 : f32
    %172 = vector.broadcast %cst_64 : f32 to vector<128x1xf32>
    %173 = arith.maximumf %171, %172 : vector<128x1xf32>
    %174 = vector.broadcast %164 : vector<128x1xf32> to vector<128x128xf32>
    %175 = arith.subf %158, %174 : vector<128x128xf32>
    %cst_65 = arith.constant 9.99999974E-6 : f32
    %176 = vector.broadcast %cst_65 : f32 to vector<128x1xf32>
    %177 = arith.addf %173, %176 : vector<128x1xf32>
    %178 = math.rsqrt %177 : vector<128x1xf32>
    %179 = vector.broadcast %178 : vector<128x1xf32> to vector<128x128xf32>
    %180 = arith.mulf %175, %179 : vector<128x128xf32>
    %181 = vector.broadcast %159 : vector<1x128xf32> to vector<128x128xf32>
    %182 = arith.mulf %180, %181 : vector<128x128xf32>
    %183 = vector.broadcast %160 : vector<1x128xf32> to vector<128x128xf32>
    %184 = arith.addf %182, %183 : vector<128x128xf32>
    %cst_66 = arith.constant 0.000000e+00 : f32
    %185 = vector.broadcast %cst_66 : f32 to vector<128x128xf32>
    %186 = arith.maximumf %184, %185 : vector<128x128xf32>
    %187 = vector.shape_cast %186 : vector<128x128xf32> to vector<16x8x128xf32>
    %c0_67 = arith.constant 0 : index
    %c0_68 = arith.constant 0 : index
    %c0_69 = arith.constant 0 : index
    %188 = vector.load %arg8[%c0_67, %c0_68, %c0_69] : memref<16x8x128xf32, #tpu.memory_space<vmem>>, vector<16x8x128xf32>
    tpu.vector_store %arg8[%c0_67, %c0_68, %c0_69], %187 {strides = array<i32>} : memref<16x8x128xf32, #tpu.memory_space<vmem>>, vector<16x8x128xf32>,
    return
  }
  func.func @transform_0(%arg0: i32) -> (i32, i32) {
    %c0_i32 = arith.constant 0 : i32
    %c0_i32_0 = arith.constant 0 : i32
    return %arg0, %c0_i32 : i32, i32
  }
  func.func @transform_1(%arg0: i32) -> (i32, i32, i32) {
    %c0_i32 = arith.constant 0 : i32
    %c0_i32_0 = arith.constant 0 : i32
    %c0_i32_1 = arith.constant 0 : i32
    return %arg0, %c0_i32, %c0_i32_0 : i32, i32, i32
  }
  func.func @transform_2(%arg0: i32) -> (i32, i32) {
    %c0_i32 = arith.constant 0 : i32
    %c0_i32_0 = arith.constant 0 : i32
    %c0_i32_1 = arith.constant 0 : i32
    return %c0_i32, %c0_i32_0 : i32, i32
  }
  func.func @transform_3(%arg0: i32) -> (i32, i32) {
    %c0_i32 = arith.constant 0 : i32
    %c0_i32_0 = arith.constant 0 : i32
    %c0_i32_1 = arith.constant 0 : i32
    return %c0_i32, %c0_i32_0 : i32, i32
  }
  func.func @transform_4(%arg0: i32) -> (i32, i32) {
    %c0_i32 = arith.constant 0 : i32
    %c0_i32_0 = arith.constant 0 : i32
    %c0_i32_1 = arith.constant 0 : i32
    return %c0_i32, %c0_i32_0 : i32, i32
  }
  func.func @transform_5(%arg0: i32) -> (i32, i32) {
    %c0_i32 = arith.constant 0 : i32
    %c0_i32_0 = arith.constant 0 : i32
    %c0_i32_1 = arith.constant 0 : i32
    return %c0_i32, %c0_i32_0 : i32, i32
  }
  func.func @transform_6(%arg0: i32) -> (i32, i32) {
    %c0_i32 = arith.constant 0 : i32
    %c0_i32_0 = arith.constant 0 : i32
    %c0_i32_1 = arith.constant 0 : i32
    return %c0_i32, %c0_i32_0 : i32, i32
  }
  func.func @transform_7(%arg0: i32) -> (i32, i32, i32) {
    %c0_i32 = arith.constant 0 : i32
    %c0_i32_0 = arith.constant 0 : i32
    %c0_i32_1 = arith.constant 0 : i32
    return %arg0, %c0_i32, %c0_i32_0 : i32, i32, i32
  }
}

</mosaic_0001>

<llo_original>
// kernel: kernel_updator.1
$region0: #{kernel_updator.1}
  #allocation0 [shape = 'u32[]', space=smem, size = 0x4, offset = 0x4, fixed_abs, tag = 'smem constant byte address 0x4 - core index']
  #allocation1 [shape = 'u32[144,128]{1,0:T(1,128)}', space=vmem, size = 0x12000, scoped, tag = 'internal scratch']
  %s0 = inlined_call_operand.hbm [shape: f32[16,128], index: 0, kind: input, shape index: {}]
  %s1 = inlined_call_operand.hbm [shape: f32[16,8,128], index: 1, kind: input, shape index: {}]
  %s2 = inlined_call_operand.hbm [shape: bf16[384,256], index: 2, kind: input, shape index: {}]
  %s3 = inlined_call_operand.hbm [shape: bf16[128,128], index: 3, kind: input, shape index: {}]
  %s4 = inlined_call_operand.hbm [shape: f32[3,256], index: 4, kind: input, shape index: {}]
  %s5 = inlined_call_operand.hbm [shape: f32[8,128], index: 5, kind: input, shape index: {}]
  %s6 = inlined_call_operand.vmem [shape: f32[3,128], index: 6, kind: input, shape index: {}]
  %s7 = inlined_call_operand.hbm [shape: f32[16,8,128], index: 7, kind: output, shape index: {}]
  %s8 = sld [smem:[#allocation0]]
  $region62: #{kernel_updator.1} parent=0
    _
  %s10 = ssub.s32 1, %s8
  %s11 = scalar_select 0, %s10, %s8
  $region1: #{kernel_updator.1} parent=0
    #allocation2 [shape = 'u8[8192]{0}', space=vmem, size = 0x2000, scoped, tag = 'input window, operand 0, single buffered']
    #allocation3 [shape = 's32[1]{0}', space=sflag, size = 0x4, scoped, tag = 'scoped memory for kernel_updator.1']
    #allocation4 [shape = 's32[1]{0}', space=sflag, size = 0x4, scoped, tag = 'scoped memory for kernel_updator.1']
    #allocation5 [shape = 'u8[65536]{0}', space=vmem, size = 0x10000, scoped, tag = 'input window, operand 1, single buffered']
    #allocation6 [shape = 's32[1]{0}', space=sflag, size = 0x4, scoped, tag = 'scoped memory for kernel_updator.1']
    #allocation7 [shape = 'u8[196608]{0}', space=vmem, size = 0x30000, scoped, tag = 'input window, operand 2, single buffered']
    #allocation8 [shape = 'u8[32768]{0}', space=vmem, size = 0x8000, scoped, tag = 'input window, operand 3, single buffered']
    #allocation9 [shape = 's32[1]{0}', space=sflag, size = 0x4, scoped, tag = 'scoped memory for kernel_updator.1']
    #allocation10 [shape = 'u8[4096]{0}', space=vmem, size = 0x1000, scoped, tag = 'input window, operand 4, single buffered']
    #allocation11 [shape = 'u8[4096]{0}', space=vmem, size = 0x1000, scoped, tag = 'input window, operand 5, single buffered']
    #allocation12 [shape = 's32[1]{0}', space=sflag, size = 0x4, scoped, tag = 'scoped memory for kernel_updator.1']
    #allocation13 [shape = 'u8[65536]{0}', space=vmem, size = 0x10000, scoped, tag = 'output window, operand 0, single buffered']
    %12 = vsyncpa [#allocation3], 0
    %13 = vsyncpa [#allocation6], 0
    %14 = vsyncpa [#allocation9], 0
    %15 = vsyncpa [#allocation12], 0
    %16 = vsyncpa [#allocation4], 0
    // Predicated region
    $region2: #{kernel_updator.1} parent=1 // pred_check
      _
    $region3: #{kernel_updator.1} parent=1 // pred_check_branch
      %18 = sbr.rel (0) target = $region5
    $region4: #{kernel_updator.1} parent=1 // pred_region
      %s20 = ssub.s32 256, 256
      %21 = vsyncadd [#allocation3], %s20
      %s22 = sshll.u32 [#allocation2], 4
      %s23 = int_to_ptr.vmem [resolvable:$true] %s22
      %28 = dma.hbm_to_vmem [thread:$0]  %s0, 256, %s23, [#allocation3], 128, 128, 8
    $region5: #{kernel_updator.1} parent=1 // pred_fallthru
      _
    // Predicated region
    $region6: #{kernel_updator.1} parent=1 // pred_check
      _
    $region7: #{kernel_updator.1} parent=1 // pred_check_branch
      %30 = sbr.rel (0) target = $region9
    $region8: #{kernel_updator.1} parent=1 // pred_region
      %s32 = ssub.s32 2048, 2048
      %33 = vsyncadd [#allocation6], %s32
      %s34 = sshll.u32 [#allocation5], 4
      %s35 = int_to_ptr.vmem [resolvable:$true] %s34
      %40 = dma.hbm_to_vmem [thread:$0]  %s1, 2048, %s35, [#allocation6], 128, 128, 8
    $region9: #{kernel_updator.1} parent=1 // pred_fallthru
      _
    // Predicated region
    $region10: #{kernel_updator.1} parent=1 // pred_check
      _
    $region11: #{kernel_updator.1} parent=1 // pred_check_branch
      %42 = sbr.rel (0) target = $region13
    $region12: #{kernel_updator.1} parent=1 // pred_region
      %s44 = ssub.s32 6144, 6144
      %45 = vsyncadd [#allocation6], %s44
      %s46 = sshll.u32 [#allocation7], 4
      %s47 = int_to_ptr.vmem [resolvable:$true] %s46
      %52 = dma.hbm_to_vmem [thread:$0]  %s2, 6144, %s47, [#allocation6], 128, 128, 8
    $region13: #{kernel_updator.1} parent=1 // pred_fallthru
      _
    // Predicated region
    $region14: #{kernel_updator.1} parent=1 // pred_check
      _
    $region15: #{kernel_updator.1} parent=1 // pred_check_branch
      %54 = sbr.rel (0) target = $region17
    $region16: #{kernel_updator.1} parent=1 // pred_region
      %s56 = ssub.s32 1024, 1024
      %57 = vsyncadd [#allocation9], %s56
      %s58 = sshll.u32 [#allocation8], 4
      %s59 = int_to_ptr.vmem [resolvable:$true] %s58
      %64 = dma.hbm_to_vmem [thread:$0]  %s3, 1024, %s59, [#allocation9], 64, 64, 4
    $region17: #{kernel_updator.1} parent=1 // pred_fallthru
      _
    // Predicated region
    $region18: #{kernel_updator.1} parent=1 // pred_check
      _
    $region19: #{kernel_updator.1} parent=1 // pred_check_branch
      %66 = sbr.rel (0) target = $region21
    $region20: #{kernel_updator.1} parent=1 // pred_region
      %s68 = ssub.s32 128, 128
      %69 = vsyncadd [#allocation9], %s68
      %s71 = sshll.u32 [#allocation10], 4
      %s72 = int_to_ptr.vmem [resolvable:$true] %s71
      %74 = dma.hbm_to_vmem [thread:$0]  %s4, 128, %s72, [#allocation9]
    $region21: #{kernel_updator.1} parent=1 // pred_fallthru
      _
    // Predicated region
    $region22: #{kernel_updator.1} parent=1 // pred_check
      _
    $region23: #{kernel_updator.1} parent=1 // pred_check_branch
      %76 = sbr.rel (0) target = $region25
    $region24: #{kernel_updator.1} parent=1 // pred_region
      %s78 = ssub.s32 128, 128
      %79 = vsyncadd [#allocation12], %s78
      %s81 = sshll.u32 [#allocation11], 4
      %s82 = int_to_ptr.vmem [resolvable:$true] %s81
      %84 = dma.hbm_to_vmem [thread:$0]  %s5, 128, %s82, [#allocation12]
    $region25: #{kernel_updator.1} parent=1 // pred_fallthru
      _
    // Predicated region
    $region26: #{kernel_updator.1} parent=1 // pred_check
      _
    $region27: #{kernel_updator.1} parent=1 // pred_check_branch
      %86 = sbr.rel (0) target = $region29
    $region28: #{kernel_updator.1} parent=1 // pred_region
      _
    $region29: #{kernel_updator.1} parent=1 // pred_fallthru
      _
    // Predicated region
    $region30: #{kernel_updator.1} parent=1 // pred_check
      _
    $region31: #{kernel_updator.1} parent=1 // pred_check_branch
      %88 = sbr.rel (0) target = $region33
    $region32: #{kernel_updator.1} parent=1 // pred_region
      %89 = dma.done [#allocation3], 256
    $region33: #{kernel_updator.1} parent=1 // pred_fallthru
      _
    // Predicated region
    $region34: #{kernel_updator.1} parent=1 // pred_check
      _
    $region35: #{kernel_updator.1} parent=1 // pred_check_branch
      %91 = sbr.rel (0) target = $region37
    $region36: #{kernel_updator.1} parent=1 // pred_region
      %92 = dma.done [#allocation6], 2048
    $region37: #{kernel_updator.1} parent=1 // pred_fallthru
      _
    // Predicated region
    $region38: #{kernel_updator.1} parent=1 // pred_check
      _
    $region39: #{kernel_updator.1} parent=1 // pred_check_branch
      %94 = sbr.rel (0) target = $region41
    $region40: #{kernel_updator.1} parent=1 // pred_region
      %95 = dma.done [#allocation6], 6144
    $region41: #{kernel_updator.1} parent=1 // pred_fallthru
      _
    // Predicated region
    $region42: #{kernel_updator.1} parent=1 // pred_check
      _
    $region43: #{kernel_updator.1} parent=1 // pred_check_branch
      %97 = sbr.rel (0) target = $region45
    $region44: #{kernel_updator.1} parent=1 // pred_region
      %98 = dma.done [#allocation9], 1024
    $region45: #{kernel_updator.1} parent=1 // pred_fallthru
      _
    // Predicated region
    $region46: #{kernel_updator.1} parent=1 // pred_check
      _
    $region47: #{kernel_updator.1} parent=1 // pred_check_branch
      %100 = sbr.rel (0) target = $region49
    $region48: #{kernel_updator.1} parent=1 // pred_region
      %101 = dma.done [#allocation9], 128
    $region49: #{kernel_updator.1} parent=1 // pred_fallthru
      _
    // Predicated region
    $region50: #{kernel_updator.1} parent=1 // pred_check
      _
    $region51: #{kernel_updator.1} parent=1 // pred_check_branch
      %103 = sbr.rel (0) target = $region53
    $region52: #{kernel_updator.1} parent=1 // pred_region
      %104 = dma.done [#allocation12], 128
    $region53: #{kernel_updator.1} parent=1 // pred_fallthru
      _
    %v106 = vld [vmem:[#allocation5] sm:$0xff]
    %v107 = vld [vmem:[#allocation5 + $0x8] sm:$0xff]
    %v108 = vld [vmem:[#allocation5 + $0x10] sm:$0xff]
    %v109 = vld [vmem:[#allocation5 + $0x18] sm:$0xff]
    %v110 = vld [vmem:[#allocation5 + $0x20] sm:$0xff]
    %v111 = vld [vmem:[#allocation5 + $0x28] sm:$0xff]
    %v112 = vld [vmem:[#allocation5 + $0x30] sm:$0xff]
    %v113 = vld [vmem:[#allocation5 + $0x38] sm:$0xff]
    %v114 = vld [vmem:[#allocation5 + $0x40] sm:$0xff]
    %v115 = vld [vmem:[#allocation5 + $0x48] sm:$0xff]
    %v116 = vld [vmem:[#allocation5 + $0x50] sm:$0xff]
    %v117 = vld [vmem:[#allocation5 + $0x58] sm:$0xff]
    %v118 = vld [vmem:[#allocation5 + $0x60] sm:$0xff]
    %v119 = vld [vmem:[#allocation5 + $0x68] sm:$0xff]
    %v120 = vld [vmem:[#allocation5 + $0x70] sm:$0xff]
    %v121 = vld [vmem:[#allocation5 + $0x78] sm:$0xff]
    %v122 = vld [vmem:[#allocation2] sm:$0xff]
    %v123 = vld [vmem:[#allocation2 + $0x8] sm:$0xff]
    %v124 = vpack.c.bf16 %v123, %v122
    %v125 = vld [vmem:[#allocation7] sm:$0xff]
    %v126 = vld [vmem:[#allocation7 + $0x8] sm:$0xff]
    %v127 = vld [vmem:[#allocation7 + $0x10] sm:$0xff]
    %v128 = vld [vmem:[#allocation7 + $0x18] sm:$0xff]
    %v129 = vld [vmem:[#allocation7 + $0x20] sm:$0xff]
    %v130 = vld [vmem:[#allocation7 + $0x28] sm:$0xff]
    %v131 = vld [vmem:[#allocation7 + $0x30] sm:$0xff]
    %v132 = vld [vmem:[#allocation7 + $0x38] sm:$0xff]
    %v133 = vld [vmem:[#allocation7 + $0x40] sm:$0xff]
    %v134 = vld [vmem:[#allocation7 + $0x48] sm:$0xff]
    %v135 = vld [vmem:[#allocation7 + $0x50] sm:$0xff]
    %v136 = vld [vmem:[#allocation7 + $0x58] sm:$0xff]
    %v137 = vld [vmem:[#allocation7 + $0x60] sm:$0xff]
    %v138 = vld [vmem:[#allocation7 + $0x68] sm:$0xff]
    %v139 = vld [vmem:[#allocation7 + $0x70] sm:$0xff]
    %v140 = vld [vmem:[#allocation7 + $0x78] sm:$0xff]
    %v141 = vld [vmem:[#allocation10] ss:$4 sm:$0x3]
    %v143 = vlaneseq
    %v144 = vshrl.u32 %v143, 7
    %v145 = vsub.s32 0, %v144
    %v146 = vrot.slane %v141, %v145
    %v147 = vlaneseq
    %v148 = vshrl.u32 %v147, 7
    %v149 = vsub.s32 1, %v148
    %v150 = vrot.slane %v141, %v149
    %v169 = vunpack.c.l.b16 %v125
    %v170 = vunpack.c.h.b16 %v125
    %v171 = vunpack.c.l.b16 %v126
    %v172 = vunpack.c.h.b16 %v126
    %v173 = vunpack.c.l.b16 %v127
    %v174 = vunpack.c.h.b16 %v127
    %v175 = vunpack.c.l.b16 %v128
    %v176 = vunpack.c.h.b16 %v128
    %v177 = vunpack.c.l.b16 %v129
    %v178 = vunpack.c.h.b16 %v129
    %v179 = vunpack.c.l.b16 %v130
    %v180 = vunpack.c.h.b16 %v130
    %v181 = vunpack.c.l.b16 %v131
    %v182 = vunpack.c.h.b16 %v131
    %v183 = vunpack.c.l.b16 %v132
    %v184 = vunpack.c.h.b16 %v132
    %v185 = vunpack.c.l.b16 %v133
    %v186 = vunpack.c.h.b16 %v133
    %v187 = vunpack.c.l.b16 %v134
    %v188 = vunpack.c.h.b16 %v134
    %v189 = vunpack.c.l.b16 %v135
    %v190 = vunpack.c.h.b16 %v135
    %v191 = vunpack.c.l.b16 %v136
    %v192 = vunpack.c.h.b16 %v136
    %v193 = vunpack.c.l.b16 %v137
    %v194 = vunpack.c.h.b16 %v137
    %v195 = vunpack.c.l.b16 %v138
    %v196 = vunpack.c.h.b16 %v138
    %v197 = vunpack.c.l.b16 %v139
    %v198 = vunpack.c.h.b16 %v139
    %v199 = vunpack.c.l.b16 %v140
    %v200 = vunpack.c.h.b16 %v140
    %v201 = vpack.c.b16 %v171, %v169
    %v202 = vpack.c.b16 %v172, %v170
    %v203 = vpack.c.b16 %v175, %v173
    %v204 = vpack.c.b16 %v176, %v174
    %v205 = vpack.c.b16 %v179, %v177
    %v206 = vpack.c.b16 %v180, %v178
    %v207 = vpack.c.b16 %v183, %v181
    %v208 = vpack.c.b16 %v184, %v182
    %v209 = vpack.c.b16 %v187, %v185
    %v210 = vpack.c.b16 %v188, %v186
    %v211 = vpack.c.b16 %v191, %v189
    %v212 = vpack.c.b16 %v192, %v190
    %v213 = vpack.c.b16 %v195, %v193
    %v214 = vpack.c.b16 %v196, %v194
    %v215 = vpack.c.b16 %v199, %v197
    %v216 = vpack.c.b16 %v200, %v198
    %233 = vmatprep.subr.bf16.mxu0 %v216
    %234 = vmatpush1.bf16.msra.mxu0 %v215
    %235 = vmatprep.subr.bf16.mxu0 %v214
    %236 = vmatpush1.bf16.msra.mxu0 %v213
    %237 = vmatprep.subr.bf16.mxu0 %v212
    %238 = vmatpush1.bf16.msra.mxu0 %v211
    %239 = vmatprep.subr.bf16.mxu0 %v210
    %240 = vmatpush1.bf16.msra.mxu0 %v209
    %241 = vmatprep.subr.bf16.mxu0 %v208
    %242 = vmatpush1.bf16.msra.mxu0 %v207
    %243 = vmatprep.subr.bf16.mxu0 %v206
    %244 = vmatpush1.bf16.msra.mxu0 %v205
    %245 = vmatprep.subr.bf16.mxu0 %v204
    %246 = vmatpush1.bf16.msra.mxu0 %v203
    %247 = vmatprep.subr.bf16.mxu0 %v202
    %248 = vmatpush1.bf16.msra.mxu0 %v201
    %249 = vmatprep.subr.bf16.mxu0 0
    %250 = vmatpush2.bf16.msra.mxu0 0
    %251 = vmatprep.subr.bf16.mxu0 0
    %252 = vmatpush2.bf16.msra.mxu0 0
    %253 = vmatprep.subr.bf16.mxu0 0
    %254 = vmatpush2.bf16.msra.mxu0 0
    %255 = vmatprep.subr.bf16.mxu0 0
    %256 = vmatpush2.bf16.msra.mxu0 0
    %257 = vmatprep.subr.bf16.mxu0 0
    %258 = vmatpush2.bf16.msra.mxu0 0
    %259 = vmatprep.subr.bf16.mxu0 0
    %260 = vmatpush2.bf16.msra.mxu0 0
    %261 = vmatprep.subr.bf16.mxu0 0
    %262 = vmatpush2.bf16.msra.mxu0 0
    %263 = vmatprep.subr.bf16.mxu0 0
    %264 = vmatpush2.bf16.msra.mxu0 0
    %265 = vmatprep.mubr.bf16.mxu0 0
    %266 = vmatmul.mubr.bf16.gmra.mxu0 %v124
    %v267 = vpop.f32.mrf.mxu0
    %v268 = vadd.f32 %v146, %v267
    %v269 = vpop.f32.mrf.mxu0
    %v270 = vadd.f32 %v150, %v269
    %v271 = vpop.f32.mrf.mxu0
    %v272 = vadd.f32 %v146, %v271
    %v273 = vpop.f32.mrf.mxu0
    %v274 = vadd.f32 %v150, %v273
    %275 = vdwg.mxu0
    %v276 = vld [vmem:[#allocation11 + $0x2] sm:$0x1]
    %v277 = vld [vmem:[#allocation11 + $0x3] sm:$0x1]
    %278 = vadd.xlane.f32.xlu0 %v270
    %v279 = vpop.xlane.xlu0 %278
    %280 = vadd.xlane.f32.xlu0 %v274
    %v281 = vpop.xlane.xlu0 %280
    %v282 = vrcp.pop 128.0
    %v283 = vmul.f32 %v279, %v282
    %v284 = vmul.f32 %v281, %v282
    %v285 = vmul.f32 %v270, %v270
    %v286 = vmul.f32 %v274, %v274
    %287 = vadd.xlane.f32.xlu0 %v285
    %v288 = vpop.xlane.xlu0 %287
    %289 = vadd.xlane.f32.xlu0 %v286
    %v290 = vpop.xlane.xlu0 %289
    %v291 = vmul.f32 %v288, %v282
    %v292 = vmul.f32 %v290, %v282
    %v293 = vmul.f32 %v283, %v283
    %v294 = vmul.f32 %v284, %v284
    %v295 = vsub.f32 %v291, %v293
    %v296 = vsub.f32 %v292, %v294
    %v297 = vmax.f32 %v295, 0.0
    %v298 = vmax.f32 %v296, 0.0
    %v299 = vsub.f32 %v270, %v283
    %v300 = vsub.f32 %v274, %v284
    %v301 = vadd.f32 %v297, 1e-05
    %v302 = vadd.f32 %v298, 1e-05
    %v303 = vrsqrt.pop %v301
    %v304 = vrsqrt.pop %v302
    %v305 = vmul.f32 %v299, %v303
    %v306 = vmul.f32 %v300, %v304
    %v307 = vlaneseq
    %v308 = vshrl.u32 %v307, 7
    %v309 = vsub.s32 0, %v308
    %v310 = vrot.slane %v276, %v309
    %v311 = vmul.f32 %v305, %v310
    %v312 = vmul.f32 %v306, %v310
    %v313 = vlaneseq
    %v314 = vshrl.u32 %v313, 7
    %v315 = vsub.s32 0, %v314
    %v316 = vrot.slane %v277, %v315
    %v317 = vadd.f32 %v311, %v316
    %v318 = vadd.f32 %v312, %v316
    %v319 = vpack.c.bf16 %v107, %v106
    %v320 = vpack.c.bf16 %v109, %v108
    %v321 = vpack.c.bf16 %v111, %v110
    %v322 = vpack.c.bf16 %v113, %v112
    %v323 = vpack.c.bf16 %v115, %v114
    %v324 = vpack.c.bf16 %v117, %v116
    %v325 = vpack.c.bf16 %v119, %v118
    %v326 = vpack.c.bf16 %v121, %v120
    %v327 = vld [vmem:[#allocation7 + $0x80] sm:$0xff]
    %v328 = vld [vmem:[#allocation7 + $0x88] sm:$0xff]
    %v329 = vld [vmem:[#allocation7 + $0x90] sm:$0xff]
    %v330 = vld [vmem:[#allocation7 + $0x98] sm:$0xff]
    %v331 = vld [vmem:[#allocation7 + $0xa0] sm:$0xff]
    %v332 = vld [vmem:[#allocation7 + $0xa8] sm:$0xff]
    %v333 = vld [vmem:[#allocation7 + $0xb0] sm:$0xff]
    %v334 = vld [vmem:[#allocation7 + $0xb8] sm:$0xff]
    %v335 = vld [vmem:[#allocation7 + $0xc0] sm:$0xff]
    %v336 = vld [vmem:[#allocation7 + $0xc8] sm:$0xff]
    %v337 = vld [vmem:[#allocation7 + $0xd0] sm:$0xff]
    %v338 = vld [vmem:[#allocation7 + $0xd8] sm:$0xff]
    %v339 = vld [vmem:[#allocation7 + $0xe0] sm:$0xff]
    %v340 = vld [vmem:[#allocation7 + $0xe8] sm:$0xff]
    %v341 = vld [vmem:[#allocation7 + $0xf0] sm:$0xff]
    %v342 = vld [vmem:[#allocation7 + $0xf8] sm:$0xff]
    %s343 = scalar_lea.vmem [#allocation10], 1
    %v344 = vld [vmem:[%s343] ss:$4 sm:$0x3]
    %v346 = vlaneseq
    %v347 = vshrl.u32 %v346, 7
    %v348 = vsub.s32 0, %v347
    %v349 = vrot.slane %v344, %v348
    %v350 = vlaneseq
    %v351 = vshrl.u32 %v350, 7
    %v352 = vsub.s32 1, %v351
    %v353 = vrot.slane %v344, %v352
    %v372 = vunpack.c.l.b16 %v327
    %v373 = vunpack.c.h.b16 %v327
    %v374 = vunpack.c.l.b16 %v328
    %v375 = vunpack.c.h.b16 %v328
    %v376 = vunpack.c.l.b16 %v329
    %v377 = vunpack.c.h.b16 %v329
    %v378 = vunpack.c.l.b16 %v330
    %v379 = vunpack.c.h.b16 %v330
    %v380 = vunpack.c.l.b16 %v331
    %v381 = vunpack.c.h.b16 %v331
    %v382 = vunpack.c.l.b16 %v332
    %v383 = vunpack.c.h.b16 %v332
    %v384 = vunpack.c.l.b16 %v333
    %v385 = vunpack.c.h.b16 %v333
    %v386 = vunpack.c.l.b16 %v334
    %v387 = vunpack.c.h.b16 %v334
    %v388 = vunpack.c.l.b16 %v335
    %v389 = vunpack.c.h.b16 %v335
    %v390 = vunpack.c.l.b16 %v336
    %v391 = vunpack.c.h.b16 %v336
    %v392 = vunpack.c.l.b16 %v337
    %v393 = vunpack.c.h.b16 %v337
    %v394 = vunpack.c.l.b16 %v338
    %v395 = vunpack.c.h.b16 %v338
    %v396 = vunpack.c.l.b16 %v339
    %v397 = vunpack.c.h.b16 %v339
    %v398 = vunpack.c.l.b16 %v340
    %v399 = vunpack.c.h.b16 %v340
    %v400 = vunpack.c.l.b16 %v341
    %v401 = vunpack.c.h.b16 %v341
    %v402 = vunpack.c.l.b16 %v342
    %v403 = vunpack.c.h.b16 %v342
    %v404 = vpack.c.b16 %v374, %v372
    %v405 = vpack.c.b16 %v375, %v373
    %v406 = vpack.c.b16 %v378, %v376
    %v407 = vpack.c.b16 %v379, %v377
    %v408 = vpack.c.b16 %v382, %v380
    %v409 = vpack.c.b16 %v383, %v381
    %v410 = vpack.c.b16 %v386, %v384
    %v411 = vpack.c.b16 %v387, %v385
    %v412 = vpack.c.b16 %v390, %v388
    %v413 = vpack.c.b16 %v391, %v389
    %v414 = vpack.c.b16 %v394, %v392
    %v415 = vpack.c.b16 %v395, %v393
    %v416 = vpack.c.b16 %v398, %v396
    %v417 = vpack.c.b16 %v399, %v397
    %v418 = vpack.c.b16 %v402, %v400
    %v419 = vpack.c.b16 %v403, %v401
    %436 = vmatprep.subr.bf16.mxu0 %v419
    %437 = vmatpush1.bf16.msra.mxu0 %v418
    %438 = vmatprep.subr.bf16.mxu0 %v417
    %439 = vmatpush1.bf16.msra.mxu0 %v416
    %440 = vmatprep.subr.bf16.mxu0 %v415
    %441 = vmatpush1.bf16.msra.mxu0 %v414
    %442 = vmatprep.subr.bf16.mxu0 %v413
    %443 = vmatpush1.bf16.msra.mxu0 %v412
    %444 = vmatprep.subr.bf16.mxu0 %v411
    %445 = vmatpush1.bf16.msra.mxu0 %v410
    %446 = vmatprep.subr.bf16.mxu0 %v409
    %447 = vmatpush1.bf16.msra.mxu0 %v408
    %448 = vmatprep.subr.bf16.mxu0 %v407
    %449 = vmatpush1.bf16.msra.mxu0 %v406
    %450 = vmatprep.subr.bf16.mxu0 %v405
    %451 = vmatpush1.bf16.msra.mxu0 %v404
    %452 = vmatprep.subr.bf16.mxu0 0
    %453 = vmatpush2.bf16.msra.mxu0 0
    %454 = vmatprep.subr.bf16.mxu0 0
    %455 = vmatpush2.bf16.msra.mxu0 0
    %456 = vmatprep.subr.bf16.mxu0 0
    %457 = vmatpush2.bf16.msra.mxu0 0
    %458 = vmatprep.subr.bf16.mxu0 0
    %459 = vmatpush2.bf16.msra.mxu0 0
    %460 = vmatprep.subr.bf16.mxu0 0
    %461 = vmatpush2.bf16.msra.mxu0 0
    %462 = vmatprep.subr.bf16.mxu0 0
    %463 = vmatpush2.bf16.msra.mxu0 0
    %464 = vmatprep.subr.bf16.mxu0 0
    %465 = vmatpush2.bf16.msra.mxu0 0
    %466 = vmatprep.subr.bf16.mxu0 0
    %467 = vmatpush2.bf16.msra.mxu0 0
    %468 = vmatprep.mubr.bf16.mxu0 0
    %469 = vmatmul.mubr.bf16.gmra.mxu0 %v319
    %v470 = vpop.f32.mrf.mxu0
    %v471 = vadd.f32 %v349, %v470
    %v472 = vpop.f32.mrf.mxu0
    %v473 = vadd.f32 %v353, %v472
    %v474 = vpop.f32.mrf.mxu0
    %v475 = vadd.f32 %v349, %v474
    %v476 = vpop.f32.mrf.mxu0
    %v477 = vadd.f32 %v353, %v476
    %478 = vmatprep.mubr.bf16.mxu0 0
    %479 = vmatmul.mubr.bf16.gmra.mxu0 %v320
    %v480 = vpop.f32.mrf.mxu0
    %v481 = vadd.f32 %v349, %v480
    %v482 = vpop.f32.mrf.mxu0
    %v483 = vadd.f32 %v353, %v482
    %v484 = vpop.f32.mrf.mxu0
    %v485 = vadd.f32 %v349, %v484
    %v486 = vpop.f32.mrf.mxu0
    %v487 = vadd.f32 %v353, %v486
    %488 = vmatprep.mubr.bf16.mxu0 0
    %489 = vmatmul.mubr.bf16.gmra.mxu0 %v321
    %v490 = vpop.f32.mrf.mxu0
    %v491 = vadd.f32 %v349, %v490
    %v492 = vpop.f32.mrf.mxu0
    %v493 = vadd.f32 %v353, %v492
    %v494 = vpop.f32.mrf.mxu0
    %v495 = vadd.f32 %v349, %v494
    %v496 = vpop.f32.mrf.mxu0
    %v497 = vadd.f32 %v353, %v496
    %498 = vmatprep.mubr.bf16.mxu0 0
    %499 = vmatmul.mubr.bf16.gmra.mxu0 %v322
    %v500 = vpop.f32.mrf.mxu0
    %v501 = vadd.f32 %v349, %v500
    %v502 = vpop.f32.mrf.mxu0
    %v503 = vadd.f32 %v353, %v502
    %v504 = vpop.f32.mrf.mxu0
    %v505 = vadd.f32 %v349, %v504
    %v506 = vpop.f32.mrf.mxu0
    %v507 = vadd.f32 %v353, %v506
    %508 = vmatprep.mubr.bf16.mxu0 0
    %509 = vmatmul.mubr.bf16.gmra.mxu0 %v323
    %v510 = vpop.f32.mrf.mxu0
    %v511 = vadd.f32 %v349, %v510
    %v512 = vpop.f32.mrf.mxu0
    %v513 = vadd.f32 %v353, %v512
    %v514 = vpop.f32.mrf.mxu0
    %v515 = vadd.f32 %v349, %v514
    %v516 = vpop.f32.mrf.mxu0
    %v517 = vadd.f32 %v353, %v516
    %518 = vmatprep.mubr.bf16.mxu0 0
    %519 = vmatmul.mubr.bf16.gmra.mxu0 %v324
    %v520 = vpop.f32.mrf.mxu0
    %v521 = vadd.f32 %v349, %v520
    %v522 = vpop.f32.mrf.mxu0
    %v523 = vadd.f32 %v353, %v522
    %v524 = vpop.f32.mrf.mxu0
    %v525 = vadd.f32 %v349, %v524
    %v526 = vpop.f32.mrf.mxu0
    %v527 = vadd.f32 %v353, %v526
    %528 = vmatprep.mubr.bf16.mxu0 0
    %529 = vmatmul.mubr.bf16.gmra.mxu0 %v325
    %v530 = vpop.f32.mrf.mxu0
    %v531 = vadd.f32 %v349, %v530
    %v532 = vpop.f32.mrf.mxu0
    %v533 = vadd.f32 %v353, %v532
    %v534 = vpop.f32.mrf.mxu0
    %v535 = vadd.f32 %v349, %v534
    %v536 = vpop.f32.mrf.mxu0
    %v537 = vadd.f32 %v353, %v536
    %538 = vmatprep.mubr.bf16.mxu0 0
    %539 = vmatmul.mubr.bf16.gmra.mxu0 %v326
    %v540 = vpop.f32.mrf.mxu0
    %v541 = vadd.f32 %v349, %v540
    %v542 = vpop.f32.mrf.mxu0
    %v543 = vadd.f32 %v353, %v542
    %v544 = vpop.f32.mrf.mxu0
    %v545 = vadd.f32 %v349, %v544
    %v546 = vpop.f32.mrf.mxu0
    %v547 = vadd.f32 %v353, %v546
    %548 = vdwg.mxu0
    %v549 = vld [vmem:[#allocation11 + $0x6] sm:$0x1]
    %v550 = vld [vmem:[#allocation11 + $0x7] sm:$0x1]
    %551 = vadd.xlane.f32.xlu0 %v473
    %v552 = vpop.xlane.xlu0 %551
    %553 = vadd.xlane.f32.xlu0 %v477
    %v554 = vpop.xlane.xlu0 %553
    %555 = vadd.xlane.f32.xlu0 %v483
    %v556 = vpop.xlane.xlu0 %555
    %557 = vadd.xlane.f32.xlu0 %v487
    %v558 = vpop.xlane.xlu0 %557
    %559 = vadd.xlane.f32.xlu0 %v493
    %v560 = vpop.xlane.xlu0 %559
    %561 = vadd.xlane.f32.xlu0 %v497
    %v562 = vpop.xlane.xlu0 %561
    %563 = vadd.xlane.f32.xlu0 %v503
    %v564 = vpop.xlane.xlu0 %563
    %565 = vadd.xlane.f32.xlu0 %v507
    %v566 = vpop.xlane.xlu0 %565
    %567 = vadd.xlane.f32.xlu0 %v513
    %v568 = vpop.xlane.xlu0 %567
    %569 = vadd.xlane.f32.xlu0 %v517
    %v570 = vpop.xlane.xlu0 %569
    %571 = vadd.xlane.f32.xlu0 %v523
    %v572 = vpop.xlane.xlu0 %571
    %573 = vadd.xlane.f32.xlu0 %v527
    %v574 = vpop.xlane.xlu0 %573
    %575 = vadd.xlane.f32.xlu0 %v533
    %v576 = vpop.xlane.xlu0 %575
    %577 = vadd.xlane.f32.xlu0 %v537
    %v578 = vpop.xlane.xlu0 %577
    %579 = vadd.xlane.f32.xlu0 %v543
    %v580 = vpop.xlane.xlu0 %579
    %581 = vadd.xlane.f32.xlu0 %v547
    %v582 = vpop.xlane.xlu0 %581
    %v583 = vmul.f32 %v552, %v282
    %v584 = vmul.f32 %v554, %v282
    %v585 = vmul.f32 %v556, %v282
    %v586 = vmul.f32 %v558, %v282
    %v587 = vmul.f32 %v560, %v282
    %v588 = vmul.f32 %v562, %v282
    %v589 = vmul.f32 %v564, %v282
    %v590 = vmul.f32 %v566, %v282
    %v591 = vmul.f32 %v568, %v282
    %v592 = vmul.f32 %v570, %v282
    %v593 = vmul.f32 %v572, %v282
    %v594 = vmul.f32 %v574, %v282
    %v595 = vmul.f32 %v576, %v282
    %v596 = vmul.f32 %v578, %v282
    %v597 = vmul.f32 %v580, %v282
    %v598 = vmul.f32 %v582, %v282
    %v599 = vmul.f32 %v473, %v473
    %v600 = vmul.f32 %v477, %v477
    %v601 = vmul.f32 %v483, %v483
    %v602 = vmul.f32 %v487, %v487
    %v603 = vmul.f32 %v493, %v493
    %v604 = vmul.f32 %v497, %v497
    %v605 = vmul.f32 %v503, %v503
    %v606 = vmul.f32 %v507, %v507
    %v607 = vmul.f32 %v513, %v513
    %v608 = vmul.f32 %v517, %v517
    %v609 = vmul.f32 %v523, %v523
    %v610 = vmul.f32 %v527, %v527
    %v611 = vmul.f32 %v533, %v533
    %v612 = vmul.f32 %v537, %v537
    %v613 = vmul.f32 %v543, %v543
    %v614 = vmul.f32 %v547, %v547
    %615 = vadd.xlane.f32.xlu0 %v599
    %v616 = vpop.xlane.xlu0 %615
    %617 = vadd.xlane.f32.xlu0 %v600
    %v618 = vpop.xlane.xlu0 %617
    %619 = vadd.xlane.f32.xlu0 %v601
    %v620 = vpop.xlane.xlu0 %619
    %621 = vadd.xlane.f32.xlu0 %v602
    %v622 = vpop.xlane.xlu0 %621
    %623 = vadd.xlane.f32.xlu0 %v603
    %v624 = vpop.xlane.xlu0 %623
    %625 = vadd.xlane.f32.xlu0 %v604
    %v626 = vpop.xlane.xlu0 %625
    %627 = vadd.xlane.f32.xlu0 %v605
    %v628 = vpop.xlane.xlu0 %627
    %629 = vadd.xlane.f32.xlu0 %v606
    %v630 = vpop.xlane.xlu0 %629
    %631 = vadd.xlane.f32.xlu0 %v607
    %v632 = vpop.xlane.xlu0 %631
    %633 = vadd.xlane.f32.xlu0 %v608
    %v634 = vpop.xlane.xlu0 %633
    %635 = vadd.xlane.f32.xlu0 %v609
    %v636 = vpop.xlane.xlu0 %635
    %637 = vadd.xlane.f32.xlu0 %v610
    %v638 = vpop.xlane.xlu0 %637
    %639 = vadd.xlane.f32.xlu0 %v611
    %v640 = vpop.xlane.xlu0 %639
    %641 = vadd.xlane.f32.xlu0 %v612
    %v642 = vpop.xlane.xlu0 %641
    %643 = vadd.xlane.f32.xlu0 %v613
    %v644 = vpop.xlane.xlu0 %643
    %645 = vadd.xlane.f32.xlu0 %v614
    %v646 = vpop.xlane.xlu0 %645
    %v647 = vmul.f32 %v616, %v282
    %v648 = vmul.f32 %v618, %v282
    %v649 = vmul.f32 %v620, %v282
    %v650 = vmul.f32 %v622, %v282
    %v651 = vmul.f32 %v624, %v282
    %v652 = vmul.f32 %v626, %v282
    %v653 = vmul.f32 %v628, %v282
    %v654 = vmul.f32 %v630, %v282
    %v655 = vmul.f32 %v632, %v282
    %v656 = vmul.f32 %v634, %v282
    %v657 = vmul.f32 %v636, %v282
    %v658 = vmul.f32 %v638, %v282
    %v659 = vmul.f32 %v640, %v282
    %v660 = vmul.f32 %v642, %v282
    %v661 = vmul.f32 %v644, %v282
    %v662 = vmul.f32 %v646, %v282
    %v663 = vmul.f32 %v583, %v583
    %v664 = vmul.f32 %v584, %v584
    %v665 = vmul.f32 %v585, %v585
    %v666 = vmul.f32 %v586, %v586
    %v667 = vmul.f32 %v587, %v587
    %v668 = vmul.f32 %v588, %v588
    %v669 = vmul.f32 %v589, %v589
    %v670 = vmul.f32 %v590, %v590
    %v671 = vmul.f32 %v591, %v591
    %v672 = vmul.f32 %v592, %v592
    %v673 = vmul.f32 %v593, %v593
    %v674 = vmul.f32 %v594, %v594
    %v675 = vmul.f32 %v595, %v595
    %v676 = vmul.f32 %v596, %v596
    %v677 = vmul.f32 %v597, %v597
    %v678 = vmul.f32 %v598, %v598
    %v679 = vsub.f32 %v647, %v663
    %v680 = vsub.f32 %v648, %v664
    %v681 = vsub.f32 %v649, %v665
    %v682 = vsub.f32 %v650, %v666
    %v683 = vsub.f32 %v651, %v667
    %v684 = vsub.f32 %v652, %v668
    %v685 = vsub.f32 %v653, %v669
    %v686 = vsub.f32 %v654, %v670
    %v687 = vsub.f32 %v655, %v671
    %v688 = vsub.f32 %v656, %v672
    %v689 = vsub.f32 %v657, %v673
    %v690 = vsub.f32 %v658, %v674
    %v691 = vsub.f32 %v659, %v675
    %v692 = vsub.f32 %v660, %v676
    %v693 = vsub.f32 %v661, %v677
    %v694 = vsub.f32 %v662, %v678
    %v695 = vmax.f32 %v679, 0.0
    %v696 = vmax.f32 %v680, 0.0
    %v697 = vmax.f32 %v681, 0.0
    %v698 = vmax.f32 %v682, 0.0
    %v699 = vmax.f32 %v683, 0.0
    %v700 = vmax.f32 %v684, 0.0
    %v701 = vmax.f32 %v685, 0.0
    %v702 = vmax.f32 %v686, 0.0
    %v703 = vmax.f32 %v687, 0.0
    %v704 = vmax.f32 %v688, 0.0
    %v705 = vmax.f32 %v689, 0.0
    %v706 = vmax.f32 %v690, 0.0
    %v707 = vmax.f32 %v691, 0.0
    %v708 = vmax.f32 %v692, 0.0
    %v709 = vmax.f32 %v693, 0.0
    %v710 = vmax.f32 %v694, 0.0
    %v711 = vsub.f32 %v473, %v583
    %v712 = vsub.f32 %v477, %v584
    %v713 = vsub.f32 %v483, %v585
    %v714 = vsub.f32 %v487, %v586
    %v715 = vsub.f32 %v493, %v587
    %v716 = vsub.f32 %v497, %v588
    %v717 = vsub.f32 %v503, %v589
    %v718 = vsub.f32 %v507, %v590
    %v719 = vsub.f32 %v513, %v591
    %v720 = vsub.f32 %v517, %v592
    %v721 = vsub.f32 %v523, %v593
    %v722 = vsub.f32 %v527, %v594
    %v723 = vsub.f32 %v533, %v595
    %v724 = vsub.f32 %v537, %v596
    %v725 = vsub.f32 %v543, %v597
    %v726 = vsub.f32 %v547, %v598
    %v727 = vadd.f32 %v695, 1e-05
    %v728 = vadd.f32 %v696, 1e-05
    %v729 = vadd.f32 %v697, 1e-05
    %v730 = vadd.f32 %v698, 1e-05
    %v731 = vadd.f32 %v699, 1e-05
    %v732 = vadd.f32 %v700, 1e-05
    %v733 = vadd.f32 %v701, 1e-05
    %v734 = vadd.f32 %v702, 1e-05
    %v735 = vadd.f32 %v703, 1e-05
    %v736 = vadd.f32 %v704, 1e-05
    %v737 = vadd.f32 %v705, 1e-05
    %v738 = vadd.f32 %v706, 1e-05
    %v739 = vadd.f32 %v707, 1e-05
    %v740 = vadd.f32 %v708, 1e-05
    %v741 = vadd.f32 %v709, 1e-05
    %v742 = vadd.f32 %v710, 1e-05
    %v743 = vrsqrt.pop %v727
    %v744 = vrsqrt.pop %v728
    %v745 = vrsqrt.pop %v729
    %v746 = vrsqrt.pop %v730
    %v747 = vrsqrt.pop %v731
    %v748 = vrsqrt.pop %v732
    %v749 = vrsqrt.pop %v733
    %v750 = vrsqrt.pop %v734
    %v751 = vrsqrt.pop %v735
    %v752 = vrsqrt.pop %v736
    %v753 = vrsqrt.pop %v737
    %v754 = vrsqrt.pop %v738
    %v755 = vrsqrt.pop %v739
    %v756 = vrsqrt.pop %v740
    %v757 = vrsqrt.pop %v741
    %v758 = vrsqrt.pop %v742
    %v759 = vmul.f32 %v711, %v743
    %v760 = vmul.f32 %v712, %v744
    %v761 = vmul.f32 %v713, %v745
    %v762 = vmul.f32 %v714, %v746
    %v763 = vmul.f32 %v715, %v747
    %v764 = vmul.f32 %v716, %v748
    %v765 = vmul.f32 %v717, %v749
    %v766 = vmul.f32 %v718, %v750
    %v767 = vmul.f32 %v719, %v751
    %v768 = vmul.f32 %v720, %v752
    %v769 = vmul.f32 %v721, %v753
    %v770 = vmul.f32 %v722, %v754
    %v771 = vmul.f32 %v723, %v755
    %v772 = vmul.f32 %v724, %v756
    %v773 = vmul.f32 %v725, %v757
    %v774 = vmul.f32 %v726, %v758
    %v775 = vlaneseq
    %v776 = vshrl.u32 %v775, 7
    %v777 = vsub.s32 0, %v776
    %v778 = vrot.slane %v549, %v777
    %v779 = vmul.f32 %v759, %v778
    %v780 = vmul.f32 %v760, %v778
    %v781 = vmul.f32 %v761, %v778
    %v782 = vmul.f32 %v762, %v778
    %v783 = vmul.f32 %v763, %v778
    %v784 = vmul.f32 %v764, %v778
    %v785 = vmul.f32 %v765, %v778
    %v786 = vmul.f32 %v766, %v778
    %v787 = vmul.f32 %v767, %v778
    %v788 = vmul.f32 %v768, %v778
    %v789 = vmul.f32 %v769, %v778
    %v790 = vmul.f32 %v770, %v778
    %v791 = vmul.f32 %v771, %v778
    %v792 = vmul.f32 %v772, %v778
    %v793 = vmul.f32 %v773, %v778
    %v794 = vmul.f32 %v774, %v778
    %v795 = vlaneseq
    %v796 = vshrl.u32 %v795, 7
    %v797 = vsub.s32 0, %v796
    %v798 = vrot.slane %v550, %v797
    %v799 = vadd.f32 %v779, %v798
    %v800 = vadd.f32 %v780, %v798
    %v801 = vadd.f32 %v781, %v798
    %v802 = vadd.f32 %v782, %v798
    %v803 = vadd.f32 %v783, %v798
    %v804 = vadd.f32 %v784, %v798
    %v805 = vadd.f32 %v785, %v798
    %v806 = vadd.f32 %v786, %v798
    %v807 = vadd.f32 %v787, %v798
    %v808 = vadd.f32 %v788, %v798
    %v809 = vadd.f32 %v789, %v798
    %v810 = vadd.f32 %v790, %v798
    %v811 = vadd.f32 %v791, %v798
    %v812 = vadd.f32 %v792, %v798
    %v813 = vadd.f32 %v793, %v798
    %v814 = vadd.f32 %v794, %v798
    %v817 = vcombine.high %v268, %v268
    %v819 = vunpack.c.l.s4 1966171168
    %v820 = vunpack.c.0.s8 %v819
    %v821 = vlaneseq
    %v822 = vshrl.u32 %v821, 7
    %v823 = vsub.s32 %v820, %v822
    %v824 = vrot.slane %v268, %v823
    %v826 = vunpack.c.l.s4 1966171168
    %v827 = vunpack.c.0.s8 %v826
    %v828 = vlaneseq
    %v829 = vshrl.u32 %v828, 7
    %v830 = vsub.s32 %v827, %v829
    %v831 = vrot.slane %v817, %v830
    %v832 = vcombine.high %v824, %v824
    %v833 = vcombine.high %v831, %v831
    %v835 = vunpack.c.l.s4 1966171168
    %v836 = vunpack.c.0.s8 %v835
    %v837 = vlaneseq
    %v838 = vshrl.u32 %v837, 7
    %v839 = vsub.s32 %v836, %v838
    %v840 = vrot.slane %v824, %v839
    %v842 = vunpack.c.l.s4 1966171168
    %v843 = vunpack.c.0.s8 %v842
    %v844 = vlaneseq
    %v845 = vshrl.u32 %v844, 7
    %v846 = vsub.s32 %v843, %v845
    %v847 = vrot.slane %v831, %v846
    %v849 = vunpack.c.l.s4 1966171168
    %v850 = vunpack.c.0.s8 %v849
    %v851 = vlaneseq
    %v852 = vshrl.u32 %v851, 7
    %v853 = vsub.s32 %v850, %v852
    %v854 = vrot.slane %v832, %v853
    %v856 = vunpack.c.l.s4 1966171168
    %v857 = vunpack.c.0.s8 %v856
    %v858 = vlaneseq
    %v859 = vshrl.u32 %v858, 7
    %v860 = vsub.s32 %v857, %v859
    %v861 = vrot.slane %v833, %v860
    %v862 = vcombine.high %v840, %v840
    %v863 = vcombine.high %v847, %v847
    %v864 = vcombine.high %v854, %v854
    %v865 = vcombine.high %v861, %v861
    %v866 = vcombine.high %v272, %v272
    %v868 = vunpack.c.l.s4 1966171168
    %v869 = vunpack.c.0.s8 %v868
    %v870 = vlaneseq
    %v871 = vshrl.u32 %v870, 7
    %v872 = vsub.s32 %v869, %v871
    %v873 = vrot.slane %v272, %v872
    %v875 = vunpack.c.l.s4 1966171168
    %v876 = vunpack.c.0.s8 %v875
    %v877 = vlaneseq
    %v878 = vshrl.u32 %v877, 7
    %v879 = vsub.s32 %v876, %v878
    %v880 = vrot.slane %v866, %v879
    %v881 = vcombine.high %v873, %v873
    %v882 = vcombine.high %v880, %v880
    %v884 = vunpack.c.l.s4 1966171168
    %v885 = vunpack.c.0.s8 %v884
    %v886 = vlaneseq
    %v887 = vshrl.u32 %v886, 7
    %v888 = vsub.s32 %v885, %v887
    %v889 = vrot.slane %v873, %v888
    %v891 = vunpack.c.l.s4 1966171168
    %v892 = vunpack.c.0.s8 %v891
    %v893 = vlaneseq
    %v894 = vshrl.u32 %v893, 7
    %v895 = vsub.s32 %v892, %v894
    %v896 = vrot.slane %v880, %v895
    %v898 = vunpack.c.l.s4 1966171168
    %v899 = vunpack.c.0.s8 %v898
    %v900 = vlaneseq
    %v901 = vshrl.u32 %v900, 7
    %v902 = vsub.s32 %v899, %v901
    %v903 = vrot.slane %v881, %v902
    %v905 = vunpack.c.l.s4 1966171168
    %v906 = vunpack.c.0.s8 %v905
    %v907 = vlaneseq
    %v908 = vshrl.u32 %v907, 7
    %v909 = vsub.s32 %v906, %v908
    %v910 = vrot.slane %v882, %v909
    %v911 = vcombine.high %v889, %v889
    %v912 = vcombine.high %v896, %v896
    %v913 = vcombine.high %v903, %v903
    %v914 = vcombine.high %v910, %v910
    %v915 = vlaneseq
    %v916 = vshrl.u32 %v915, 7
    %v917 = vsub.s32 0, %v916
    %v918 = vrot.slane %v840, %v917
    %v919 = vlaneseq
    %v920 = vshrl.u32 %v919, 7
    %v921 = vsub.s32 0, %v920
    %v922 = vrot.slane %v854, %v921
    %v923 = vlaneseq
    %v924 = vshrl.u32 %v923, 7
    %v925 = vsub.s32 0, %v924
    %v926 = vrot.slane %v862, %v925
    %v927 = vlaneseq
    %v928 = vshrl.u32 %v927, 7
    %v929 = vsub.s32 0, %v928
    %v930 = vrot.slane %v864, %v929
    %v931 = vlaneseq
    %v932 = vshrl.u32 %v931, 7
    %v933 = vsub.s32 0, %v932
    %v934 = vrot.slane %v847, %v933
    %v935 = vlaneseq
    %v936 = vshrl.u32 %v935, 7
    %v937 = vsub.s32 0, %v936
    %v938 = vrot.slane %v861, %v937
    %v939 = vlaneseq
    %v940 = vshrl.u32 %v939, 7
    %v941 = vsub.s32 0, %v940
    %v942 = vrot.slane %v863, %v941
    %v943 = vlaneseq
    %v944 = vshrl.u32 %v943, 7
    %v945 = vsub.s32 0, %v944
    %v946 = vrot.slane %v865, %v945
    %v947 = vlaneseq
    %v948 = vshrl.u32 %v947, 7
    %v949 = vsub.s32 0, %v948
    %v950 = vrot.slane %v889, %v949
    %v951 = vlaneseq
    %v952 = vshrl.u32 %v951, 7
    %v953 = vsub.s32 0, %v952
    %v954 = vrot.slane %v903, %v953
    %v955 = vlaneseq
    %v956 = vshrl.u32 %v955, 7
    %v957 = vsub.s32 0, %v956
    %v958 = vrot.slane %v911, %v957
    %v959 = vlaneseq
    %v960 = vshrl.u32 %v959, 7
    %v961 = vsub.s32 0, %v960
    %v962 = vrot.slane %v913, %v961
    %v963 = vlaneseq
    %v964 = vshrl.u32 %v963, 7
    %v965 = vsub.s32 0, %v964
    %v966 = vrot.slane %v896, %v965
    %v967 = vlaneseq
    %v968 = vshrl.u32 %v967, 7
    %v969 = vsub.s32 0, %v968
    %v970 = vrot.slane %v910, %v969
    %v971 = vlaneseq
    %v972 = vshrl.u32 %v971, 7
    %v973 = vsub.s32 0, %v972
    %v974 = vrot.slane %v912, %v973
    %v975 = vlaneseq
    %v976 = vshrl.u32 %v975, 7
    %v977 = vsub.s32 0, %v976
    %v978 = vrot.slane %v914, %v977
    %v995 = vmul.f32 %v471, %v918
    %v996 = vmul.f32 %v475, %v922
    %v997 = vmul.f32 %v481, %v926
    %v998 = vmul.f32 %v485, %v930
    %v999 = vmul.f32 %v491, %v934
    %v1000 = vmul.f32 %v495, %v938
    %v1001 = vmul.f32 %v501, %v942
    %v1002 = vmul.f32 %v505, %v946
    %v1003 = vmul.f32 %v511, %v950
    %v1004 = vmul.f32 %v515, %v954
    %v1005 = vmul.f32 %v521, %v958
    %v1006 = vmul.f32 %v525, %v962
    %v1007 = vmul.f32 %v531, %v966
    %v1008 = vmul.f32 %v535, %v970
    %v1009 = vmul.f32 %v541, %v974
    %v1010 = vmul.f32 %v545, %v978
    %v1011 = vpack.c.bf16 %v996, %v995
    %v1012 = vpack.c.bf16 %v998, %v997
    %v1013 = vpack.c.bf16 %v1000, %v999
    %v1014 = vpack.c.bf16 %v1002, %v1001
    %v1015 = vpack.c.bf16 %v1004, %v1003
    %v1016 = vpack.c.bf16 %v1006, %v1005
    %v1017 = vpack.c.bf16 %v1008, %v1007
    %v1018 = vpack.c.bf16 %v1010, %v1009
    %v1019 = vld [vmem:[#allocation7 + $0x100] sm:$0xff]
    %v1020 = vld [vmem:[#allocation7 + $0x108] sm:$0xff]
    %v1021 = vld [vmem:[#allocation7 + $0x110] sm:$0xff]
    %v1022 = vld [vmem:[#allocation7 + $0x118] sm:$0xff]
    %v1023 = vld [vmem:[#allocation7 + $0x120] sm:$0xff]
    %v1024 = vld [vmem:[#allocation7 + $0x128] sm:$0xff]
    %v1025 = vld [vmem:[#allocation7 + $0x130] sm:$0xff]
    %v1026 = vld [vmem:[#allocation7 + $0x138] sm:$0xff]
    %v1027 = vld [vmem:[#allocation7 + $0x140] sm:$0xff]
    %v1028 = vld [vmem:[#allocation7 + $0x148] sm:$0xff]
    %v1029 = vld [vmem:[#allocation7 + $0x150] sm:$0xff]
    %v1030 = vld [vmem:[#allocation7 + $0x158] sm:$0xff]
    %v1031 = vld [vmem:[#allocation7 + $0x160] sm:$0xff]
    %v1032 = vld [vmem:[#allocation7 + $0x168] sm:$0xff]
    %v1033 = vld [vmem:[#allocation7 + $0x170] sm:$0xff]
    %v1034 = vld [vmem:[#allocation7 + $0x178] sm:$0xff]
    %s1035 = scalar_lea.vmem [#allocation10], 2
    %v1036 = vld [vmem:[%s1035] ss:$4 sm:$0x3]
    %v1038 = vlaneseq
    %v1039 = vshrl.u32 %v1038, 7
    %v1040 = vsub.s32 0, %v1039
    %v1041 = vrot.slane %v1036, %v1040
    %v1042 = vlaneseq
    %v1043 = vshrl.u32 %v1042, 7
    %v1044 = vsub.s32 1, %v1043
    %v1045 = vrot.slane %v1036, %v1044
    %v1064 = vunpack.c.l.b16 %v1019
    %v1065 = vunpack.c.h.b16 %v1019
    %v1066 = vunpack.c.l.b16 %v1020
    %v1067 = vunpack.c.h.b16 %v1020
    %v1068 = vunpack.c.l.b16 %v1021
    %v1069 = vunpack.c.h.b16 %v1021
    %v1070 = vunpack.c.l.b16 %v1022
    %v1071 = vunpack.c.h.b16 %v1022
    %v1072 = vunpack.c.l.b16 %v1023
    %v1073 = vunpack.c.h.b16 %v1023
    %v1074 = vunpack.c.l.b16 %v1024
    %v1075 = vunpack.c.h.b16 %v1024
    %v1076 = vunpack.c.l.b16 %v1025
    %v1077 = vunpack.c.h.b16 %v1025
    %v1078 = vunpack.c.l.b16 %v1026
    %v1079 = vunpack.c.h.b16 %v1026
    %v1080 = vunpack.c.l.b16 %v1027
    %v1081 = vunpack.c.h.b16 %v1027
    %v1082 = vunpack.c.l.b16 %v1028
    %v1083 = vunpack.c.h.b16 %v1028
    %v1084 = vunpack.c.l.b16 %v1029
    %v1085 = vunpack.c.h.b16 %v1029
    %v1086 = vunpack.c.l.b16 %v1030
    %v1087 = vunpack.c.h.b16 %v1030
    %v1088 = vunpack.c.l.b16 %v1031
    %v1089 = vunpack.c.h.b16 %v1031
    %v1090 = vunpack.c.l.b16 %v1032
    %v1091 = vunpack.c.h.b16 %v1032
    %v1092 = vunpack.c.l.b16 %v1033
    %v1093 = vunpack.c.h.b16 %v1033
    %v1094 = vunpack.c.l.b16 %v1034
    %v1095 = vunpack.c.h.b16 %v1034
    %v1096 = vpack.c.b16 %v1066, %v1064
    %v1097 = vpack.c.b16 %v1067, %v1065
    %v1098 = vpack.c.b16 %v1070, %v1068
    %v1099 = vpack.c.b16 %v1071, %v1069
    %v1100 = vpack.c.b16 %v1074, %v1072
    %v1101 = vpack.c.b16 %v1075, %v1073
    %v1102 = vpack.c.b16 %v1078, %v1076
    %v1103 = vpack.c.b16 %v1079, %v1077
    %v1104 = vpack.c.b16 %v1082, %v1080
    %v1105 = vpack.c.b16 %v1083, %v1081
    %v1106 = vpack.c.b16 %v1086, %v1084
    %v1107 = vpack.c.b16 %v1087, %v1085
    %v1108 = vpack.c.b16 %v1090, %v1088
    %v1109 = vpack.c.b16 %v1091, %v1089
    %v1110 = vpack.c.b16 %v1094, %v1092
    %v1111 = vpack.c.b16 %v1095, %v1093
    %1128 = vmatprep.subr.bf16.mxu0 %v1111
    %1129 = vmatpush1.bf16.msra.mxu0 %v1110
    %1130 = vmatprep.subr.bf16.mxu0 %v1109
    %1131 = vmatpush1.bf16.msra.mxu0 %v1108
    %1132 = vmatprep.subr.bf16.mxu0 %v1107
    %1133 = vmatpush1.bf16.msra.mxu0 %v1106
    %1134 = vmatprep.subr.bf16.mxu0 %v1105
    %1135 = vmatpush1.bf16.msra.mxu0 %v1104
    %1136 = vmatprep.subr.bf16.mxu0 %v1103
    %1137 = vmatpush1.bf16.msra.mxu0 %v1102
    %1138 = vmatprep.subr.bf16.mxu0 %v1101
    %1139 = vmatpush1.bf16.msra.mxu0 %v1100
    %1140 = vmatprep.subr.bf16.mxu0 %v1099
    %1141 = vmatpush1.bf16.msra.mxu0 %v1098
    %1142 = vmatprep.subr.bf16.mxu0 %v1097
    %1143 = vmatpush1.bf16.msra.mxu0 %v1096
    %1144 = vmatprep.subr.bf16.mxu0 0
    %1145 = vmatpush2.bf16.msra.mxu0 0
    %1146 = vmatprep.subr.bf16.mxu0 0
    %1147 = vmatpush2.bf16.msra.mxu0 0
    %1148 = vmatprep.subr.bf16.mxu0 0
    %1149 = vmatpush2.bf16.msra.mxu0 0
    %1150 = vmatprep.subr.bf16.mxu0 0
    %1151 = vmatpush2.bf16.msra.mxu0 0
    %1152 = vmatprep.subr.bf16.mxu0 0
    %1153 = vmatpush2.bf16.msra.mxu0 0
    %1154 = vmatprep.subr.bf16.mxu0 0
    %1155 = vmatpush2.bf16.msra.mxu0 0
    %1156 = vmatprep.subr.bf16.mxu0 0
    %1157 = vmatpush2.bf16.msra.mxu0 0
    %1158 = vmatprep.subr.bf16.mxu0 0
    %1159 = vmatpush2.bf16.msra.mxu0 0
    %1160 = vmatprep.mubr.bf16.mxu0 0
    %1161 = vmatmul.mubr.bf16.gmra.mxu0 %v1011
    %v1162 = vpop.f32.mrf.mxu0
    %v1163 = vadd.f32 %v1041, %v1162
    %v1164 = vpop.f32.mrf.mxu0
    %v1165 = vadd.f32 %v1045, %v1164
    %v1166 = vpop.f32.mrf.mxu0
    %v1167 = vadd.f32 %v1041, %v1166
    %v1168 = vpop.f32.mrf.mxu0
    %v1169 = vadd.f32 %v1045, %v1168
    %1170 = vmatprep.mubr.bf16.mxu0 0
    %1171 = vmatmul.mubr.bf16.gmra.mxu0 %v1012
    %v1172 = vpop.f32.mrf.mxu0
    %v1173 = vadd.f32 %v1041, %v1172
    %v1174 = vpop.f32.mrf.mxu0
    %v1175 = vadd.f32 %v1045, %v1174
    %v1176 = vpop.f32.mrf.mxu0
    %v1177 = vadd.f32 %v1041, %v1176
    %v1178 = vpop.f32.mrf.mxu0
    %v1179 = vadd.f32 %v1045, %v1178
    %1180 = vmatprep.mubr.bf16.mxu0 0
    %1181 = vmatmul.mubr.bf16.gmra.mxu0 %v1013
    %v1182 = vpop.f32.mrf.mxu0
    %v1183 = vadd.f32 %v1041, %v1182
    %v1184 = vpop.f32.mrf.mxu0
    %v1185 = vadd.f32 %v1045, %v1184
    %v1186 = vpop.f32.mrf.mxu0
    %v1187 = vadd.f32 %v1041, %v1186
    %v1188 = vpop.f32.mrf.mxu0
    %v1189 = vadd.f32 %v1045, %v1188
    %1190 = vmatprep.mubr.bf16.mxu0 0
    %1191 = vmatmul.mubr.bf16.gmra.mxu0 %v1014
    %v1192 = vpop.f32.mrf.mxu0
    %v1193 = vadd.f32 %v1041, %v1192
    %v1194 = vpop.f32.mrf.mxu0
    %v1195 = vadd.f32 %v1045, %v1194
    %v1196 = vpop.f32.mrf.mxu0
    %v1197 = vadd.f32 %v1041, %v1196
    %v1198 = vpop.f32.mrf.mxu0
    %v1199 = vadd.f32 %v1045, %v1198
    %1200 = vmatprep.mubr.bf16.mxu0 0
    %1201 = vmatmul.mubr.bf16.gmra.mxu0 %v1015
    %v1202 = vpop.f32.mrf.mxu0
    %v1203 = vadd.f32 %v1041, %v1202
    %v1204 = vpop.f32.mrf.mxu0
    %v1205 = vadd.f32 %v1045, %v1204
    %v1206 = vpop.f32.mrf.mxu0
    %v1207 = vadd.f32 %v1041, %v1206
    %v1208 = vpop.f32.mrf.mxu0
    %v1209 = vadd.f32 %v1045, %v1208
    %1210 = vmatprep.mubr.bf16.mxu0 0
    %1211 = vmatmul.mubr.bf16.gmra.mxu0 %v1016
    %v1212 = vpop.f32.mrf.mxu0
    %v1213 = vadd.f32 %v1041, %v1212
    %v1214 = vpop.f32.mrf.mxu0
    %v1215 = vadd.f32 %v1045, %v1214
    %v1216 = vpop.f32.mrf.mxu0
    %v1217 = vadd.f32 %v1041, %v1216
    %v1218 = vpop.f32.mrf.mxu0
    %v1219 = vadd.f32 %v1045, %v1218
    %1220 = vmatprep.mubr.bf16.mxu0 0
    %1221 = vmatmul.mubr.bf16.gmra.mxu0 %v1017
    %v1222 = vpop.f32.mrf.mxu0
    %v1223 = vadd.f32 %v1041, %v1222
    %v1224 = vpop.f32.mrf.mxu0
    %v1225 = vadd.f32 %v1045, %v1224
    %v1226 = vpop.f32.mrf.mxu0
    %v1227 = vadd.f32 %v1041, %v1226
    %v1228 = vpop.f32.mrf.mxu0
    %v1229 = vadd.f32 %v1045, %v1228
    %1230 = vmatprep.mubr.bf16.mxu0 0
    %1231 = vmatmul.mubr.bf16.gmra.mxu0 %v1018
    %v1232 = vpop.f32.mrf.mxu0
    %v1233 = vadd.f32 %v1041, %v1232
    %v1234 = vpop.f32.mrf.mxu0
    %v1235 = vadd.f32 %v1045, %v1234
    %v1236 = vpop.f32.mrf.mxu0
    %v1237 = vadd.f32 %v1041, %v1236
    %v1238 = vpop.f32.mrf.mxu0
    %v1239 = vadd.f32 %v1045, %v1238
    %1240 = vdwg.mxu0
    %v1241 = vld [vmem:[#allocation11 + $0x4] sm:$0x1]
    %v1242 = vld [vmem:[#allocation11 + $0x5] sm:$0x1]
    %1243 = vadd.xlane.f32.xlu0 %v1163
    %v1244 = vpop.xlane.xlu0 %1243
    %1245 = vadd.xlane.f32.xlu0 %v1167
    %v1246 = vpop.xlane.xlu0 %1245
    %1247 = vadd.xlane.f32.xlu0 %v1173
    %v1248 = vpop.xlane.xlu0 %1247
    %1249 = vadd.xlane.f32.xlu0 %v1177
    %v1250 = vpop.xlane.xlu0 %1249
    %1251 = vadd.xlane.f32.xlu0 %v1183
    %v1252 = vpop.xlane.xlu0 %1251
    %1253 = vadd.xlane.f32.xlu0 %v1187
    %v1254 = vpop.xlane.xlu0 %1253
    %1255 = vadd.xlane.f32.xlu0 %v1193
    %v1256 = vpop.xlane.xlu0 %1255
    %1257 = vadd.xlane.f32.xlu0 %v1197
    %v1258 = vpop.xlane.xlu0 %1257
    %1259 = vadd.xlane.f32.xlu0 %v1203
    %v1260 = vpop.xlane.xlu0 %1259
    %1261 = vadd.xlane.f32.xlu0 %v1207
    %v1262 = vpop.xlane.xlu0 %1261
    %1263 = vadd.xlane.f32.xlu0 %v1213
    %v1264 = vpop.xlane.xlu0 %1263
    %1265 = vadd.xlane.f32.xlu0 %v1217
    %v1266 = vpop.xlane.xlu0 %1265
    %1267 = vadd.xlane.f32.xlu0 %v1223
    %v1268 = vpop.xlane.xlu0 %1267
    %1269 = vadd.xlane.f32.xlu0 %v1227
    %v1270 = vpop.xlane.xlu0 %1269
    %1271 = vadd.xlane.f32.xlu0 %v1233
    %v1272 = vpop.xlane.xlu0 %1271
    %1273 = vadd.xlane.f32.xlu0 %v1237
    %v1274 = vpop.xlane.xlu0 %1273
    %v1275 = vmul.f32 %v1244, %v282
    %v1276 = vmul.f32 %v1246, %v282
    %v1277 = vmul.f32 %v1248, %v282
    %v1278 = vmul.f32 %v1250, %v282
    %v1279 = vmul.f32 %v1252, %v282
    %v1280 = vmul.f32 %v1254, %v282
    %v1281 = vmul.f32 %v1256, %v282
    %v1282 = vmul.f32 %v1258, %v282
    %v1283 = vmul.f32 %v1260, %v282
    %v1284 = vmul.f32 %v1262, %v282
    %v1285 = vmul.f32 %v1264, %v282
    %v1286 = vmul.f32 %v1266, %v282
    %v1287 = vmul.f32 %v1268, %v282
    %v1288 = vmul.f32 %v1270, %v282
    %v1289 = vmul.f32 %v1272, %v282
    %v1290 = vmul.f32 %v1274, %v282
    %v1291 = vmul.f32 %v1163, %v1163
    %v1292 = vmul.f32 %v1167, %v1167
    %v1293 = vmul.f32 %v1173, %v1173
    %v1294 = vmul.f32 %v1177, %v1177
    %v1295 = vmul.f32 %v1183, %v1183
    %v1296 = vmul.f32 %v1187, %v1187
    %v1297 = vmul.f32 %v1193, %v1193
    %v1298 = vmul.f32 %v1197, %v1197
    %v1299 = vmul.f32 %v1203, %v1203
    %v1300 = vmul.f32 %v1207, %v1207
    %v1301 = vmul.f32 %v1213, %v1213
    %v1302 = vmul.f32 %v1217, %v1217
    %v1303 = vmul.f32 %v1223, %v1223
    %v1304 = vmul.f32 %v1227, %v1227
    %v1305 = vmul.f32 %v1233, %v1233
    %v1306 = vmul.f32 %v1237, %v1237
    %1307 = vadd.xlane.f32.xlu0 %v1291
    %v1308 = vpop.xlane.xlu0 %1307
    %1309 = vadd.xlane.f32.xlu0 %v1292
    %v1310 = vpop.xlane.xlu0 %1309
    %1311 = vadd.xlane.f32.xlu0 %v1293
    %v1312 = vpop.xlane.xlu0 %1311
    %1313 = vadd.xlane.f32.xlu0 %v1294
    %v1314 = vpop.xlane.xlu0 %1313
    %1315 = vadd.xlane.f32.xlu0 %v1295
    %v1316 = vpop.xlane.xlu0 %1315
    %1317 = vadd.xlane.f32.xlu0 %v1296
    %v1318 = vpop.xlane.xlu0 %1317
    %1319 = vadd.xlane.f32.xlu0 %v1297
    %v1320 = vpop.xlane.xlu0 %1319
    %1321 = vadd.xlane.f32.xlu0 %v1298
    %v1322 = vpop.xlane.xlu0 %1321
    %1323 = vadd.xlane.f32.xlu0 %v1299
    %v1324 = vpop.xlane.xlu0 %1323
    %1325 = vadd.xlane.f32.xlu0 %v1300
    %v1326 = vpop.xlane.xlu0 %1325
    %1327 = vadd.xlane.f32.xlu0 %v1301
    %v1328 = vpop.xlane.xlu0 %1327
    %1329 = vadd.xlane.f32.xlu0 %v1302
    %v1330 = vpop.xlane.xlu0 %1329
    %1331 = vadd.xlane.f32.xlu0 %v1303
    %v1332 = vpop.xlane.xlu0 %1331
    %1333 = vadd.xlane.f32.xlu0 %v1304
    %v1334 = vpop.xlane.xlu0 %1333
    %1335 = vadd.xlane.f32.xlu0 %v1305
    %v1336 = vpop.xlane.xlu0 %1335
    %1337 = vadd.xlane.f32.xlu0 %v1306
    %v1338 = vpop.xlane.xlu0 %1337
    %v1339 = vmul.f32 %v1308, %v282
    %v1340 = vmul.f32 %v1310, %v282
    %v1341 = vmul.f32 %v1312, %v282
    %v1342 = vmul.f32 %v1314, %v282
    %v1343 = vmul.f32 %v1316, %v282
    %v1344 = vmul.f32 %v1318, %v282
    %v1345 = vmul.f32 %v1320, %v282
    %v1346 = vmul.f32 %v1322, %v282
    %v1347 = vmul.f32 %v1324, %v282
    %v1348 = vmul.f32 %v1326, %v282
    %v1349 = vmul.f32 %v1328, %v282
    %v1350 = vmul.f32 %v1330, %v282
    %v1351 = vmul.f32 %v1332, %v282
    %v1352 = vmul.f32 %v1334, %v282
    %v1353 = vmul.f32 %v1336, %v282
    %v1354 = vmul.f32 %v1338, %v282
    %v1355 = vmul.f32 %v1275, %v1275
    %v1356 = vmul.f32 %v1276, %v1276
    %v1357 = vmul.f32 %v1277, %v1277
    %v1358 = vmul.f32 %v1278, %v1278
    %v1359 = vmul.f32 %v1279, %v1279
    %v1360 = vmul.f32 %v1280, %v1280
    %v1361 = vmul.f32 %v1281, %v1281
    %v1362 = vmul.f32 %v1282, %v1282
    %v1363 = vmul.f32 %v1283, %v1283
    %v1364 = vmul.f32 %v1284, %v1284
    %v1365 = vmul.f32 %v1285, %v1285
    %v1366 = vmul.f32 %v1286, %v1286
    %v1367 = vmul.f32 %v1287, %v1287
    %v1368 = vmul.f32 %v1288, %v1288
    %v1369 = vmul.f32 %v1289, %v1289
    %v1370 = vmul.f32 %v1290, %v1290
    %v1371 = vsub.f32 %v1339, %v1355
    %v1372 = vsub.f32 %v1340, %v1356
    %v1373 = vsub.f32 %v1341, %v1357
    %v1374 = vsub.f32 %v1342, %v1358
    %v1375 = vsub.f32 %v1343, %v1359
    %v1376 = vsub.f32 %v1344, %v1360
    %v1377 = vsub.f32 %v1345, %v1361
    %v1378 = vsub.f32 %v1346, %v1362
    %v1379 = vsub.f32 %v1347, %v1363
    %v1380 = vsub.f32 %v1348, %v1364
    %v1381 = vsub.f32 %v1349, %v1365
    %v1382 = vsub.f32 %v1350, %v1366
    %v1383 = vsub.f32 %v1351, %v1367
    %v1384 = vsub.f32 %v1352, %v1368
    %v1385 = vsub.f32 %v1353, %v1369
    %v1386 = vsub.f32 %v1354, %v1370
    %v1387 = vmax.f32 %v1371, 0.0
    %v1388 = vmax.f32 %v1372, 0.0
    %v1389 = vmax.f32 %v1373, 0.0
    %v1390 = vmax.f32 %v1374, 0.0
    %v1391 = vmax.f32 %v1375, 0.0
    %v1392 = vmax.f32 %v1376, 0.0
    %v1393 = vmax.f32 %v1377, 0.0
    %v1394 = vmax.f32 %v1378, 0.0
    %v1395 = vmax.f32 %v1379, 0.0
    %v1396 = vmax.f32 %v1380, 0.0
    %v1397 = vmax.f32 %v1381, 0.0
    %v1398 = vmax.f32 %v1382, 0.0
    %v1399 = vmax.f32 %v1383, 0.0
    %v1400 = vmax.f32 %v1384, 0.0
    %v1401 = vmax.f32 %v1385, 0.0
    %v1402 = vmax.f32 %v1386, 0.0
    %v1403 = vsub.f32 %v1163, %v1275
    %v1404 = vsub.f32 %v1167, %v1276
    %v1405 = vsub.f32 %v1173, %v1277
    %v1406 = vsub.f32 %v1177, %v1278
    %v1407 = vsub.f32 %v1183, %v1279
    %v1408 = vsub.f32 %v1187, %v1280
    %v1409 = vsub.f32 %v1193, %v1281
    %v1410 = vsub.f32 %v1197, %v1282
    %v1411 = vsub.f32 %v1203, %v1283
    %v1412 = vsub.f32 %v1207, %v1284
    %v1413 = vsub.f32 %v1213, %v1285
    %v1414 = vsub.f32 %v1217, %v1286
    %v1415 = vsub.f32 %v1223, %v1287
    %v1416 = vsub.f32 %v1227, %v1288
    %v1417 = vsub.f32 %v1233, %v1289
    %v1418 = vsub.f32 %v1237, %v1290
    %v1419 = vadd.f32 %v1387, 1e-05
    %v1420 = vadd.f32 %v1388, 1e-05
    %v1421 = vadd.f32 %v1389, 1e-05
    %v1422 = vadd.f32 %v1390, 1e-05
    %v1423 = vadd.f32 %v1391, 1e-05
    %v1424 = vadd.f32 %v1392, 1e-05
    %v1425 = vadd.f32 %v1393, 1e-05
    %v1426 = vadd.f32 %v1394, 1e-05
    %v1427 = vadd.f32 %v1395, 1e-05
    %v1428 = vadd.f32 %v1396, 1e-05
    %v1429 = vadd.f32 %v1397, 1e-05
    %v1430 = vadd.f32 %v1398, 1e-05
    %v1431 = vadd.f32 %v1399, 1e-05
    %v1432 = vadd.f32 %v1400, 1e-05
    %v1433 = vadd.f32 %v1401, 1e-05
    %v1434 = vadd.f32 %v1402, 1e-05
    %v1435 = vrsqrt.pop %v1419
    %v1436 = vrsqrt.pop %v1420
    %v1437 = vrsqrt.pop %v1421
    %v1438 = vrsqrt.pop %v1422
    %v1439 = vrsqrt.pop %v1423
    %v1440 = vrsqrt.pop %v1424
    %v1441 = vrsqrt.pop %v1425
    %v1442 = vrsqrt.pop %v1426
    %v1443 = vrsqrt.pop %v1427
    %v1444 = vrsqrt.pop %v1428
    %v1445 = vrsqrt.pop %v1429
    %v1446 = vrsqrt.pop %v1430
    %v1447 = vrsqrt.pop %v1431
    %v1448 = vrsqrt.pop %v1432
    %v1449 = vrsqrt.pop %v1433
    %v1450 = vrsqrt.pop %v1434
    %v1451 = vmul.f32 %v1403, %v1435
    %v1452 = vmul.f32 %v1404, %v1436
    %v1453 = vmul.f32 %v1405, %v1437
    %v1454 = vmul.f32 %v1406, %v1438
    %v1455 = vmul.f32 %v1407, %v1439
    %v1456 = vmul.f32 %v1408, %v1440
    %v1457 = vmul.f32 %v1409, %v1441
    %v1458 = vmul.f32 %v1410, %v1442
    %v1459 = vmul.f32 %v1411, %v1443
    %v1460 = vmul.f32 %v1412, %v1444
    %v1461 = vmul.f32 %v1413, %v1445
    %v1462 = vmul.f32 %v1414, %v1446
    %v1463 = vmul.f32 %v1415, %v1447
    %v1464 = vmul.f32 %v1416, %v1448
    %v1465 = vmul.f32 %v1417, %v1449
    %v1466 = vmul.f32 %v1418, %v1450
    %v1467 = vlaneseq
    %v1468 = vshrl.u32 %v1467, 7
    %v1469 = vsub.s32 0, %v1468
    %v1470 = vrot.slane %v1241, %v1469
    %v1471 = vmul.f32 %v1451, %v1470
    %v1472 = vmul.f32 %v1452, %v1470
    %v1473 = vmul.f32 %v1453, %v1470
    %v1474 = vmul.f32 %v1454, %v1470
    %v1475 = vmul.f32 %v1455, %v1470
    %v1476 = vmul.f32 %v1456, %v1470
    %v1477 = vmul.f32 %v1457, %v1470
    %v1478 = vmul.f32 %v1458, %v1470
    %v1479 = vmul.f32 %v1459, %v1470
    %v1480 = vmul.f32 %v1460, %v1470
    %v1481 = vmul.f32 %v1461, %v1470
    %v1482 = vmul.f32 %v1462, %v1470
    %v1483 = vmul.f32 %v1463, %v1470
    %v1484 = vmul.f32 %v1464, %v1470
    %v1485 = vmul.f32 %v1465, %v1470
    %v1486 = vmul.f32 %v1466, %v1470
    %v1487 = vlaneseq
    %v1488 = vshrl.u32 %v1487, 7
    %v1489 = vsub.s32 0, %v1488
    %v1490 = vrot.slane %v1242, %v1489
    %v1491 = vadd.f32 %v1471, %v1490
    %v1492 = vadd.f32 %v1472, %v1490
    %v1493 = vadd.f32 %v1473, %v1490
    %v1494 = vadd.f32 %v1474, %v1490
    %v1495 = vadd.f32 %v1475, %v1490
    %v1496 = vadd.f32 %v1476, %v1490
    %v1497 = vadd.f32 %v1477, %v1490
    %v1498 = vadd.f32 %v1478, %v1490
    %v1499 = vadd.f32 %v1479, %v1490
    %v1500 = vadd.f32 %v1480, %v1490
    %v1501 = vadd.f32 %v1481, %v1490
    %v1502 = vadd.f32 %v1482, %v1490
    %v1503 = vadd.f32 %v1483, %v1490
    %v1504 = vadd.f32 %v1484, %v1490
    %v1505 = vadd.f32 %v1485, %v1490
    %v1506 = vadd.f32 %v1486, %v1490
    %v1507 = vxor.u32 %v1491, 2147483648
    %v1508 = vxor.u32 %v1492, 2147483648
    %v1509 = vxor.u32 %v1493, 2147483648
    %v1510 = vxor.u32 %v1494, 2147483648
    %v1511 = vxor.u32 %v1495, 2147483648
    %v1512 = vxor.u32 %v1496, 2147483648
    %v1513 = vxor.u32 %v1497, 2147483648
    %v1514 = vxor.u32 %v1498, 2147483648
    %v1515 = vxor.u32 %v1499, 2147483648
    %v1516 = vxor.u32 %v1500, 2147483648
    %v1517 = vxor.u32 %v1501, 2147483648
    %v1518 = vxor.u32 %v1502, 2147483648
    %v1519 = vxor.u32 %v1503, 2147483648
    %v1520 = vxor.u32 %v1504, 2147483648
    %v1521 = vxor.u32 %v1505, 2147483648
    %v1522 = vxor.u32 %v1506, 2147483648
    %v1523 = vmul.f32 %v1507, 1.442695
    %v1524 = vpow.pop %v1523
    %v1525 = vmul.f32 %v1508, 1.442695
    %v1526 = vpow.pop %v1525
    %v1527 = vmul.f32 %v1509, 1.442695
    %v1528 = vpow.pop %v1527
    %v1529 = vmul.f32 %v1510, 1.442695
    %v1530 = vpow.pop %v1529
    %v1531 = vmul.f32 %v1511, 1.442695
    %v1532 = vpow.pop %v1531
    %v1533 = vmul.f32 %v1512, 1.442695
    %v1534 = vpow.pop %v1533
    %v1535 = vmul.f32 %v1513, 1.442695
    %v1536 = vpow.pop %v1535
    %v1537 = vmul.f32 %v1514, 1.442695
    %v1538 = vpow.pop %v1537
    %v1539 = vmul.f32 %v1515, 1.442695
    %v1540 = vpow.pop %v1539
    %v1541 = vmul.f32 %v1516, 1.442695
    %v1542 = vpow.pop %v1541
    %v1543 = vmul.f32 %v1517, 1.442695
    %v1544 = vpow.pop %v1543
    %v1545 = vmul.f32 %v1518, 1.442695
    %v1546 = vpow.pop %v1545
    %v1547 = vmul.f32 %v1519, 1.442695
    %v1548 = vpow.pop %v1547
    %v1549 = vmul.f32 %v1520, 1.442695
    %v1550 = vpow.pop %v1549
    %v1551 = vmul.f32 %v1521, 1.442695
    %v1552 = vpow.pop %v1551
    %v1553 = vmul.f32 %v1522, 1.442695
    %v1554 = vpow.pop %v1553
    %v1555 = vadd.f32 %v1524, 1.0
    %v1556 = vadd.f32 %v1526, 1.0
    %v1557 = vadd.f32 %v1528, 1.0
    %v1558 = vadd.f32 %v1530, 1.0
    %v1559 = vadd.f32 %v1532, 1.0
    %v1560 = vadd.f32 %v1534, 1.0
    %v1561 = vadd.f32 %v1536, 1.0
    %v1562 = vadd.f32 %v1538, 1.0
    %v1563 = vadd.f32 %v1540, 1.0
    %v1564 = vadd.f32 %v1542, 1.0
    %v1565 = vadd.f32 %v1544, 1.0
    %v1566 = vadd.f32 %v1546, 1.0
    %v1567 = vadd.f32 %v1548, 1.0
    %v1568 = vadd.f32 %v1550, 1.0
    %v1569 = vadd.f32 %v1552, 1.0
    %v1570 = vadd.f32 %v1554, 1.0
    %v1571 = vrcp.pop %v1555
    %v1572 = vmul.f32 1.0, %v1571
    %v1573 = vrcp.pop %v1556
    %v1574 = vmul.f32 1.0, %v1573
    %v1575 = vrcp.pop %v1557
    %v1576 = vmul.f32 1.0, %v1575
    %v1577 = vrcp.pop %v1558
    %v1578 = vmul.f32 1.0, %v1577
    %v1579 = vrcp.pop %v1559
    %v1580 = vmul.f32 1.0, %v1579
    %v1581 = vrcp.pop %v1560
    %v1582 = vmul.f32 1.0, %v1581
    %v1583 = vrcp.pop %v1561
    %v1584 = vmul.f32 1.0, %v1583
    %v1585 = vrcp.pop %v1562
    %v1586 = vmul.f32 1.0, %v1585
    %v1587 = vrcp.pop %v1563
    %v1588 = vmul.f32 1.0, %v1587
    %v1589 = vrcp.pop %v1564
    %v1590 = vmul.f32 1.0, %v1589
    %v1591 = vrcp.pop %v1565
    %v1592 = vmul.f32 1.0, %v1591
    %v1593 = vrcp.pop %v1566
    %v1594 = vmul.f32 1.0, %v1593
    %v1595 = vrcp.pop %v1567
    %v1596 = vmul.f32 1.0, %v1595
    %v1597 = vrcp.pop %v1568
    %v1598 = vmul.f32 1.0, %v1597
    %v1599 = vrcp.pop %v1569
    %v1600 = vmul.f32 1.0, %v1599
    %v1601 = vrcp.pop %v1570
    %v1602 = vmul.f32 1.0, %v1601
    %v1603 = vld [vmem:[#allocation11] sm:$0x1]
    %v1604 = vld [vmem:[#allocation11 + $0x1] sm:$0x1]
    %1605 = vadd.xlane.f32.xlu0 %v1165
    %v1606 = vpop.xlane.xlu0 %1605
    %1607 = vadd.xlane.f32.xlu0 %v1169
    %v1608 = vpop.xlane.xlu0 %1607
    %1609 = vadd.xlane.f32.xlu0 %v1175
    %v1610 = vpop.xlane.xlu0 %1609
    %1611 = vadd.xlane.f32.xlu0 %v1179
    %v1612 = vpop.xlane.xlu0 %1611
    %1613 = vadd.xlane.f32.xlu0 %v1185
    %v1614 = vpop.xlane.xlu0 %1613
    %1615 = vadd.xlane.f32.xlu0 %v1189
    %v1616 = vpop.xlane.xlu0 %1615
    %1617 = vadd.xlane.f32.xlu0 %v1195
    %v1618 = vpop.xlane.xlu0 %1617
    %1619 = vadd.xlane.f32.xlu0 %v1199
    %v1620 = vpop.xlane.xlu0 %1619
    %1621 = vadd.xlane.f32.xlu0 %v1205
    %v1622 = vpop.xlane.xlu0 %1621
    %1623 = vadd.xlane.f32.xlu0 %v1209
    %v1624 = vpop.xlane.xlu0 %1623
    %1625 = vadd.xlane.f32.xlu0 %v1215
    %v1626 = vpop.xlane.xlu0 %1625
    %1627 = vadd.xlane.f32.xlu0 %v1219
    %v1628 = vpop.xlane.xlu0 %1627
    %1629 = vadd.xlane.f32.xlu0 %v1225
    %v1630 = vpop.xlane.xlu0 %1629
    %1631 = vadd.xlane.f32.xlu0 %v1229
    %v1632 = vpop.xlane.xlu0 %1631
    %1633 = vadd.xlane.f32.xlu0 %v1235
    %v1634 = vpop.xlane.xlu0 %1633
    %1635 = vadd.xlane.f32.xlu0 %v1239
    %v1636 = vpop.xlane.xlu0 %1635
    %v1637 = vmul.f32 %v1606, %v282
    %v1638 = vmul.f32 %v1608, %v282
    %v1639 = vmul.f32 %v1610, %v282
    %v1640 = vmul.f32 %v1612, %v282
    %v1641 = vmul.f32 %v1614, %v282
    %v1642 = vmul.f32 %v1616, %v282
    %v1643 = vmul.f32 %v1618, %v282
    %v1644 = vmul.f32 %v1620, %v282
    %v1645 = vmul.f32 %v1622, %v282
    %v1646 = vmul.f32 %v1624, %v282
    %v1647 = vmul.f32 %v1626, %v282
    %v1648 = vmul.f32 %v1628, %v282
    %v1649 = vmul.f32 %v1630, %v282
    %v1650 = vmul.f32 %v1632, %v282
    %v1651 = vmul.f32 %v1634, %v282
    %v1652 = vmul.f32 %v1636, %v282
    %v1653 = vmul.f32 %v1165, %v1165
    %v1654 = vmul.f32 %v1169, %v1169
    %v1655 = vmul.f32 %v1175, %v1175
    %v1656 = vmul.f32 %v1179, %v1179
    %v1657 = vmul.f32 %v1185, %v1185
    %v1658 = vmul.f32 %v1189, %v1189
    %v1659 = vmul.f32 %v1195, %v1195
    %v1660 = vmul.f32 %v1199, %v1199
    %v1661 = vmul.f32 %v1205, %v1205
    %v1662 = vmul.f32 %v1209, %v1209
    %v1663 = vmul.f32 %v1215, %v1215
    %v1664 = vmul.f32 %v1219, %v1219
    %v1665 = vmul.f32 %v1225, %v1225
    %v1666 = vmul.f32 %v1229, %v1229
    %v1667 = vmul.f32 %v1235, %v1235
    %v1668 = vmul.f32 %v1239, %v1239
    %1669 = vadd.xlane.f32.xlu0 %v1653
    %v1670 = vpop.xlane.xlu0 %1669
    %1671 = vadd.xlane.f32.xlu0 %v1654
    %v1672 = vpop.xlane.xlu0 %1671
    %1673 = vadd.xlane.f32.xlu0 %v1655
    %v1674 = vpop.xlane.xlu0 %1673
    %1675 = vadd.xlane.f32.xlu0 %v1656
    %v1676 = vpop.xlane.xlu0 %1675
    %1677 = vadd.xlane.f32.xlu0 %v1657
    %v1678 = vpop.xlane.xlu0 %1677
    %1679 = vadd.xlane.f32.xlu0 %v1658
    %v1680 = vpop.xlane.xlu0 %1679
    %1681 = vadd.xlane.f32.xlu0 %v1659
    %v1682 = vpop.xlane.xlu0 %1681
    %1683 = vadd.xlane.f32.xlu0 %v1660
    %v1684 = vpop.xlane.xlu0 %1683
    %1685 = vadd.xlane.f32.xlu0 %v1661
    %v1686 = vpop.xlane.xlu0 %1685
    %1687 = vadd.xlane.f32.xlu0 %v1662
    %v1688 = vpop.xlane.xlu0 %1687
    %1689 = vadd.xlane.f32.xlu0 %v1663
    %v1690 = vpop.xlane.xlu0 %1689
    %1691 = vadd.xlane.f32.xlu0 %v1664
    %v1692 = vpop.xlane.xlu0 %1691
    %1693 = vadd.xlane.f32.xlu0 %v1665
    %v1694 = vpop.xlane.xlu0 %1693
    %1695 = vadd.xlane.f32.xlu0 %v1666
    %v1696 = vpop.xlane.xlu0 %1695
    %1697 = vadd.xlane.f32.xlu0 %v1667
    %v1698 = vpop.xlane.xlu0 %1697
    %1699 = vadd.xlane.f32.xlu0 %v1668
    %v1700 = vpop.xlane.xlu0 %1699
    %v1701 = vmul.f32 %v1670, %v282
    %v1702 = vmul.f32 %v1672, %v282
    %v1703 = vmul.f32 %v1674, %v282
    %v1704 = vmul.f32 %v1676, %v282
    %v1705 = vmul.f32 %v1678, %v282
    %v1706 = vmul.f32 %v1680, %v282
    %v1707 = vmul.f32 %v1682, %v282
    %v1708 = vmul.f32 %v1684, %v282
    %v1709 = vmul.f32 %v1686, %v282
    %v1710 = vmul.f32 %v1688, %v282
    %v1711 = vmul.f32 %v1690, %v282
    %v1712 = vmul.f32 %v1692, %v282
    %v1713 = vmul.f32 %v1694, %v282
    %v1714 = vmul.f32 %v1696, %v282
    %v1715 = vmul.f32 %v1698, %v282
    %v1716 = vmul.f32 %v1700, %v282
    %v1717 = vmul.f32 %v1637, %v1637
    %v1718 = vmul.f32 %v1638, %v1638
    %v1719 = vmul.f32 %v1639, %v1639
    %v1720 = vmul.f32 %v1640, %v1640
    %v1721 = vmul.f32 %v1641, %v1641
    %v1722 = vmul.f32 %v1642, %v1642
    %v1723 = vmul.f32 %v1643, %v1643
    %v1724 = vmul.f32 %v1644, %v1644
    %v1725 = vmul.f32 %v1645, %v1645
    %v1726 = vmul.f32 %v1646, %v1646
    %v1727 = vmul.f32 %v1647, %v1647
    %v1728 = vmul.f32 %v1648, %v1648
    %v1729 = vmul.f32 %v1649, %v1649
    %v1730 = vmul.f32 %v1650, %v1650
    %v1731 = vmul.f32 %v1651, %v1651
    %v1732 = vmul.f32 %v1652, %v1652
    %v1733 = vsub.f32 %v1701, %v1717
    %v1734 = vsub.f32 %v1702, %v1718
    %v1735 = vsub.f32 %v1703, %v1719
    %v1736 = vsub.f32 %v1704, %v1720
    %v1737 = vsub.f32 %v1705, %v1721
    %v1738 = vsub.f32 %v1706, %v1722
    %v1739 = vsub.f32 %v1707, %v1723
    %v1740 = vsub.f32 %v1708, %v1724
    %v1741 = vsub.f32 %v1709, %v1725
    %v1742 = vsub.f32 %v1710, %v1726
    %v1743 = vsub.f32 %v1711, %v1727
    %v1744 = vsub.f32 %v1712, %v1728
    %v1745 = vsub.f32 %v1713, %v1729
    %v1746 = vsub.f32 %v1714, %v1730
    %v1747 = vsub.f32 %v1715, %v1731
    %v1748 = vsub.f32 %v1716, %v1732
    %v1749 = vmax.f32 %v1733, 0.0
    %v1750 = vmax.f32 %v1734, 0.0
    %v1751 = vmax.f32 %v1735, 0.0
    %v1752 = vmax.f32 %v1736, 0.0
    %v1753 = vmax.f32 %v1737, 0.0
    %v1754 = vmax.f32 %v1738, 0.0
    %v1755 = vmax.f32 %v1739, 0.0
    %v1756 = vmax.f32 %v1740, 0.0
    %v1757 = vmax.f32 %v1741, 0.0
    %v1758 = vmax.f32 %v1742, 0.0
    %v1759 = vmax.f32 %v1743, 0.0
    %v1760 = vmax.f32 %v1744, 0.0
    %v1761 = vmax.f32 %v1745, 0.0
    %v1762 = vmax.f32 %v1746, 0.0
    %v1763 = vmax.f32 %v1747, 0.0
    %v1764 = vmax.f32 %v1748, 0.0
    %v1765 = vsub.f32 %v1165, %v1637
    %v1766 = vsub.f32 %v1169, %v1638
    %v1767 = vsub.f32 %v1175, %v1639
    %v1768 = vsub.f32 %v1179, %v1640
    %v1769 = vsub.f32 %v1185, %v1641
    %v1770 = vsub.f32 %v1189, %v1642
    %v1771 = vsub.f32 %v1195, %v1643
    %v1772 = vsub.f32 %v1199, %v1644
    %v1773 = vsub.f32 %v1205, %v1645
    %v1774 = vsub.f32 %v1209, %v1646
    %v1775 = vsub.f32 %v1215, %v1647
    %v1776 = vsub.f32 %v1219, %v1648
    %v1777 = vsub.f32 %v1225, %v1649
    %v1778 = vsub.f32 %v1229, %v1650
    %v1779 = vsub.f32 %v1235, %v1651
    %v1780 = vsub.f32 %v1239, %v1652
    %v1781 = vadd.f32 %v1749, 1e-05
    %v1782 = vadd.f32 %v1750, 1e-05
    %v1783 = vadd.f32 %v1751, 1e-05
    %v1784 = vadd.f32 %v1752, 1e-05
    %v1785 = vadd.f32 %v1753, 1e-05
    %v1786 = vadd.f32 %v1754, 1e-05
    %v1787 = vadd.f32 %v1755, 1e-05
    %v1788 = vadd.f32 %v1756, 1e-05
    %v1789 = vadd.f32 %v1757, 1e-05
    %v1790 = vadd.f32 %v1758, 1e-05
    %v1791 = vadd.f32 %v1759, 1e-05
    %v1792 = vadd.f32 %v1760, 1e-05
    %v1793 = vadd.f32 %v1761, 1e-05
    %v1794 = vadd.f32 %v1762, 1e-05
    %v1795 = vadd.f32 %v1763, 1e-05
    %v1796 = vadd.f32 %v1764, 1e-05
    %v1797 = vrsqrt.pop %v1781
    %v1798 = vrsqrt.pop %v1782
    %v1799 = vrsqrt.pop %v1783
    %v1800 = vrsqrt.pop %v1784
    %v1801 = vrsqrt.pop %v1785
    %v1802 = vrsqrt.pop %v1786
    %v1803 = vrsqrt.pop %v1787
    %v1804 = vrsqrt.pop %v1788
    %v1805 = vrsqrt.pop %v1789
    %v1806 = vrsqrt.pop %v1790
    %v1807 = vrsqrt.pop %v1791
    %v1808 = vrsqrt.pop %v1792
    %v1809 = vrsqrt.pop %v1793
    %v1810 = vrsqrt.pop %v1794
    %v1811 = vrsqrt.pop %v1795
    %v1812 = vrsqrt.pop %v1796
    %v1813 = vmul.f32 %v1765, %v1797
    %v1814 = vmul.f32 %v1766, %v1798
    %v1815 = vmul.f32 %v1767, %v1799
    %v1816 = vmul.f32 %v1768, %v1800
    %v1817 = vmul.f32 %v1769, %v1801
    %v1818 = vmul.f32 %v1770, %v1802
    %v1819 = vmul.f32 %v1771, %v1803
    %v1820 = vmul.f32 %v1772, %v1804
    %v1821 = vmul.f32 %v1773, %v1805
    %v1822 = vmul.f32 %v1774, %v1806
    %v1823 = vmul.f32 %v1775, %v1807
    %v1824 = vmul.f32 %v1776, %v1808
    %v1825 = vmul.f32 %v1777, %v1809
    %v1826 = vmul.f32 %v1778, %v1810
    %v1827 = vmul.f32 %v1779, %v1811
    %v1828 = vmul.f32 %v1780, %v1812
    %v1829 = vlaneseq
    %v1830 = vshrl.u32 %v1829, 7
    %v1831 = vsub.s32 0, %v1830
    %v1832 = vrot.slane %v1603, %v1831
    %v1833 = vmul.f32 %v1813, %v1832
    %v1834 = vmul.f32 %v1814, %v1832
    %v1835 = vmul.f32 %v1815, %v1832
    %v1836 = vmul.f32 %v1816, %v1832
    %v1837 = vmul.f32 %v1817, %v1832
    %v1838 = vmul.f32 %v1818, %v1832
    %v1839 = vmul.f32 %v1819, %v1832
    %v1840 = vmul.f32 %v1820, %v1832
    %v1841 = vmul.f32 %v1821, %v1832
    %v1842 = vmul.f32 %v1822, %v1832
    %v1843 = vmul.f32 %v1823, %v1832
    %v1844 = vmul.f32 %v1824, %v1832
    %v1845 = vmul.f32 %v1825, %v1832
    %v1846 = vmul.f32 %v1826, %v1832
    %v1847 = vmul.f32 %v1827, %v1832
    %v1848 = vmul.f32 %v1828, %v1832
    %v1849 = vlaneseq
    %v1850 = vshrl.u32 %v1849, 7
    %v1851 = vsub.s32 0, %v1850
    %v1852 = vrot.slane %v1604, %v1851
    %v1853 = vadd.f32 %v1833, %v1852
    %v1854 = vadd.f32 %v1834, %v1852
    %v1855 = vadd.f32 %v1835, %v1852
    %v1856 = vadd.f32 %v1836, %v1852
    %v1857 = vadd.f32 %v1837, %v1852
    %v1858 = vadd.f32 %v1838, %v1852
    %v1859 = vadd.f32 %v1839, %v1852
    %v1860 = vadd.f32 %v1840, %v1852
    %v1861 = vadd.f32 %v1841, %v1852
    %v1862 = vadd.f32 %v1842, %v1852
    %v1863 = vadd.f32 %v1843, %v1852
    %v1864 = vadd.f32 %v1844, %v1852
    %v1865 = vadd.f32 %v1845, %v1852
    %v1866 = vadd.f32 %v1846, %v1852
    %v1867 = vadd.f32 %v1847, %v1852
    %v1868 = vadd.f32 %v1848, %v1852
    %v1869 = vxor.u32 %v1853, 2147483648
    %v1870 = vxor.u32 %v1854, 2147483648
    %v1871 = vxor.u32 %v1855, 2147483648
    %v1872 = vxor.u32 %v1856, 2147483648
    %v1873 = vxor.u32 %v1857, 2147483648
    %v1874 = vxor.u32 %v1858, 2147483648
    %v1875 = vxor.u32 %v1859, 2147483648
    %v1876 = vxor.u32 %v1860, 2147483648
    %v1877 = vxor.u32 %v1861, 2147483648
    %v1878 = vxor.u32 %v1862, 2147483648
    %v1879 = vxor.u32 %v1863, 2147483648
    %v1880 = vxor.u32 %v1864, 2147483648
    %v1881 = vxor.u32 %v1865, 2147483648
    %v1882 = vxor.u32 %v1866, 2147483648
    %v1883 = vxor.u32 %v1867, 2147483648
    %v1884 = vxor.u32 %v1868, 2147483648
    %v1885 = vmul.f32 %v1869, 1.442695
    %v1886 = vpow.pop %v1885
    %v1887 = vmul.f32 %v1870, 1.442695
    %v1888 = vpow.pop %v1887
    %v1889 = vmul.f32 %v1871, 1.442695
    %v1890 = vpow.pop %v1889
    %v1891 = vmul.f32 %v1872, 1.442695
    %v1892 = vpow.pop %v1891
    %v1893 = vmul.f32 %v1873, 1.442695
    %v1894 = vpow.pop %v1893
    %v1895 = vmul.f32 %v1874, 1.442695
    %v1896 = vpow.pop %v1895
    %v1897 = vmul.f32 %v1875, 1.442695
    %v1898 = vpow.pop %v1897
    %v1899 = vmul.f32 %v1876, 1.442695
    %v1900 = vpow.pop %v1899
    %v1901 = vmul.f32 %v1877, 1.442695
    %v1902 = vpow.pop %v1901
    %v1903 = vmul.f32 %v1878, 1.442695
    %v1904 = vpow.pop %v1903
    %v1905 = vmul.f32 %v1879, 1.442695
    %v1906 = vpow.pop %v1905
    %v1907 = vmul.f32 %v1880, 1.442695
    %v1908 = vpow.pop %v1907
    %v1909 = vmul.f32 %v1881, 1.442695
    %v1910 = vpow.pop %v1909
    %v1911 = vmul.f32 %v1882, 1.442695
    %v1912 = vpow.pop %v1911
    %v1913 = vmul.f32 %v1883, 1.442695
    %v1914 = vpow.pop %v1913
    %v1915 = vmul.f32 %v1884, 1.442695
    %v1916 = vpow.pop %v1915
    %v1917 = vadd.f32 %v1886, 1.0
    %v1918 = vadd.f32 %v1888, 1.0
    %v1919 = vadd.f32 %v1890, 1.0
    %v1920 = vadd.f32 %v1892, 1.0
    %v1921 = vadd.f32 %v1894, 1.0
    %v1922 = vadd.f32 %v1896, 1.0
    %v1923 = vadd.f32 %v1898, 1.0
    %v1924 = vadd.f32 %v1900, 1.0
    %v1925 = vadd.f32 %v1902, 1.0
    %v1926 = vadd.f32 %v1904, 1.0
    %v1927 = vadd.f32 %v1906, 1.0
    %v1928 = vadd.f32 %v1908, 1.0
    %v1929 = vadd.f32 %v1910, 1.0
    %v1930 = vadd.f32 %v1912, 1.0
    %v1931 = vadd.f32 %v1914, 1.0
    %v1932 = vadd.f32 %v1916, 1.0
    %v1933 = vrcp.pop %v1917
    %v1934 = vmul.f32 1.0, %v1933
    %v1935 = vrcp.pop %v1918
    %v1936 = vmul.f32 1.0, %v1935
    %v1937 = vrcp.pop %v1919
    %v1938 = vmul.f32 1.0, %v1937
    %v1939 = vrcp.pop %v1920
    %v1940 = vmul.f32 1.0, %v1939
    %v1941 = vrcp.pop %v1921
    %v1942 = vmul.f32 1.0, %v1941
    %v1943 = vrcp.pop %v1922
    %v1944 = vmul.f32 1.0, %v1943
    %v1945 = vrcp.pop %v1923
    %v1946 = vmul.f32 1.0, %v1945
    %v1947 = vrcp.pop %v1924
    %v1948 = vmul.f32 1.0, %v1947
    %v1949 = vrcp.pop %v1925
    %v1950 = vmul.f32 1.0, %v1949
    %v1951 = vrcp.pop %v1926
    %v1952 = vmul.f32 1.0, %v1951
    %v1953 = vrcp.pop %v1927
    %v1954 = vmul.f32 1.0, %v1953
    %v1955 = vrcp.pop %v1928
    %v1956 = vmul.f32 1.0, %v1955
    %v1957 = vrcp.pop %v1929
    %v1958 = vmul.f32 1.0, %v1957
    %v1959 = vrcp.pop %v1930
    %v1960 = vmul.f32 1.0, %v1959
    %v1961 = vrcp.pop %v1931
    %v1962 = vmul.f32 1.0, %v1961
    %v1963 = vrcp.pop %v1932
    %v1964 = vmul.f32 1.0, %v1963
    %v1967 = vcombine.high %v317, %v317
    %v1969 = vunpack.c.l.s4 1966171168
    %v1970 = vunpack.c.0.s8 %v1969
    %v1971 = vlaneseq
    %v1972 = vshrl.u32 %v1971, 7
    %v1973 = vsub.s32 %v1970, %v1972
    %v1974 = vrot.slane %v317, %v1973
    %v1976 = vunpack.c.l.s4 1966171168
    %v1977 = vunpack.c.0.s8 %v1976
    %v1978 = vlaneseq
    %v1979 = vshrl.u32 %v1978, 7
    %v1980 = vsub.s32 %v1977, %v1979
    %v1981 = vrot.slane %v1967, %v1980
    %v1982 = vcombine.high %v1974, %v1974
    %v1983 = vcombine.high %v1981, %v1981
    %v1985 = vunpack.c.l.s4 1966171168
    %v1986 = vunpack.c.0.s8 %v1985
    %v1987 = vlaneseq
    %v1988 = vshrl.u32 %v1987, 7
    %v1989 = vsub.s32 %v1986, %v1988
    %v1990 = vrot.slane %v1974, %v1989
    %v1992 = vunpack.c.l.s4 1966171168
    %v1993 = vunpack.c.0.s8 %v1992
    %v1994 = vlaneseq
    %v1995 = vshrl.u32 %v1994, 7
    %v1996 = vsub.s32 %v1993, %v1995
    %v1997 = vrot.slane %v1981, %v1996
    %v1999 = vunpack.c.l.s4 1966171168
    %v2000 = vunpack.c.0.s8 %v1999
    %v2001 = vlaneseq
    %v2002 = vshrl.u32 %v2001, 7
    %v2003 = vsub.s32 %v2000, %v2002
    %v2004 = vrot.slane %v1982, %v2003
    %v2006 = vunpack.c.l.s4 1966171168
    %v2007 = vunpack.c.0.s8 %v2006
    %v2008 = vlaneseq
    %v2009 = vshrl.u32 %v2008, 7
    %v2010 = vsub.s32 %v2007, %v2009
    %v2011 = vrot.slane %v1983, %v2010
    %v2012 = vcombine.high %v1990, %v1990
    %v2013 = vcombine.high %v1997, %v1997
    %v2014 = vcombine.high %v2004, %v2004
    %v2015 = vcombine.high %v2011, %v2011
    %v2016 = vcombine.high %v318, %v318
    %v2018 = vunpack.c.l.s4 1966171168
    %v2019 = vunpack.c.0.s8 %v2018
    %v2020 = vlaneseq
    %v2021 = vshrl.u32 %v2020, 7
    %v2022 = vsub.s32 %v2019, %v2021
    %v2023 = vrot.slane %v318, %v2022
    %v2025 = vunpack.c.l.s4 1966171168
    %v2026 = vunpack.c.0.s8 %v2025
    %v2027 = vlaneseq
    %v2028 = vshrl.u32 %v2027, 7
    %v2029 = vsub.s32 %v2026, %v2028
    %v2030 = vrot.slane %v2016, %v2029
    %v2031 = vcombine.high %v2023, %v2023
    %v2032 = vcombine.high %v2030, %v2030
    %v2034 = vunpack.c.l.s4 1966171168
    %v2035 = vunpack.c.0.s8 %v2034
    %v2036 = vlaneseq
    %v2037 = vshrl.u32 %v2036, 7
    %v2038 = vsub.s32 %v2035, %v2037
    %v2039 = vrot.slane %v2023, %v2038
    %v2041 = vunpack.c.l.s4 1966171168
    %v2042 = vunpack.c.0.s8 %v2041
    %v2043 = vlaneseq
    %v2044 = vshrl.u32 %v2043, 7
    %v2045 = vsub.s32 %v2042, %v2044
    %v2046 = vrot.slane %v2030, %v2045
    %v2048 = vunpack.c.l.s4 1966171168
    %v2049 = vunpack.c.0.s8 %v2048
    %v2050 = vlaneseq
    %v2051 = vshrl.u32 %v2050, 7
    %v2052 = vsub.s32 %v2049, %v2051
    %v2053 = vrot.slane %v2031, %v2052
    %v2055 = vunpack.c.l.s4 1966171168
    %v2056 = vunpack.c.0.s8 %v2055
    %v2057 = vlaneseq
    %v2058 = vshrl.u32 %v2057, 7
    %v2059 = vsub.s32 %v2056, %v2058
    %v2060 = vrot.slane %v2032, %v2059
    %v2061 = vcombine.high %v2039, %v2039
    %v2062 = vcombine.high %v2046, %v2046
    %v2063 = vcombine.high %v2053, %v2053
    %v2064 = vcombine.high %v2060, %v2060
    %v2065 = vlaneseq
    %v2066 = vshrl.u32 %v2065, 7
    %v2067 = vsub.s32 0, %v2066
    %v2068 = vrot.slane %v1990, %v2067
    %v2069 = vlaneseq
    %v2070 = vshrl.u32 %v2069, 7
    %v2071 = vsub.s32 0, %v2070
    %v2072 = vrot.slane %v2004, %v2071
    %v2073 = vlaneseq
    %v2074 = vshrl.u32 %v2073, 7
    %v2075 = vsub.s32 0, %v2074
    %v2076 = vrot.slane %v2012, %v2075
    %v2077 = vlaneseq
    %v2078 = vshrl.u32 %v2077, 7
    %v2079 = vsub.s32 0, %v2078
    %v2080 = vrot.slane %v2014, %v2079
    %v2081 = vlaneseq
    %v2082 = vshrl.u32 %v2081, 7
    %v2083 = vsub.s32 0, %v2082
    %v2084 = vrot.slane %v1997, %v2083
    %v2085 = vlaneseq
    %v2086 = vshrl.u32 %v2085, 7
    %v2087 = vsub.s32 0, %v2086
    %v2088 = vrot.slane %v2011, %v2087
    %v2089 = vlaneseq
    %v2090 = vshrl.u32 %v2089, 7
    %v2091 = vsub.s32 0, %v2090
    %v2092 = vrot.slane %v2013, %v2091
    %v2093 = vlaneseq
    %v2094 = vshrl.u32 %v2093, 7
    %v2095 = vsub.s32 0, %v2094
    %v2096 = vrot.slane %v2015, %v2095
    %v2097 = vlaneseq
    %v2098 = vshrl.u32 %v2097, 7
    %v2099 = vsub.s32 0, %v2098
    %v2100 = vrot.slane %v2039, %v2099
    %v2101 = vlaneseq
    %v2102 = vshrl.u32 %v2101, 7
    %v2103 = vsub.s32 0, %v2102
    %v2104 = vrot.slane %v2053, %v2103
    %v2105 = vlaneseq
    %v2106 = vshrl.u32 %v2105, 7
    %v2107 = vsub.s32 0, %v2106
    %v2108 = vrot.slane %v2061, %v2107
    %v2109 = vlaneseq
    %v2110 = vshrl.u32 %v2109, 7
    %v2111 = vsub.s32 0, %v2110
    %v2112 = vrot.slane %v2063, %v2111
    %v2113 = vlaneseq
    %v2114 = vshrl.u32 %v2113, 7
    %v2115 = vsub.s32 0, %v2114
    %v2116 = vrot.slane %v2046, %v2115
    %v2117 = vlaneseq
    %v2118 = vshrl.u32 %v2117, 7
    %v2119 = vsub.s32 0, %v2118
    %v2120 = vrot.slane %v2060, %v2119
    %v2121 = vlaneseq
    %v2122 = vshrl.u32 %v2121, 7
    %v2123 = vsub.s32 0, %v2122
    %v2124 = vrot.slane %v2062, %v2123
    %v2125 = vlaneseq
    %v2126 = vshrl.u32 %v2125, 7
    %v2127 = vsub.s32 0, %v2126
    %v2128 = vrot.slane %v2064, %v2127
    %v2145 = vmul.f32 %v1934, %v2068
    %v2146 = vmul.f32 %v1936, %v2072
    %v2147 = vmul.f32 %v1938, %v2076
    %v2148 = vmul.f32 %v1940, %v2080
    %v2149 = vmul.f32 %v1942, %v2084
    %v2150 = vmul.f32 %v1944, %v2088
    %v2151 = vmul.f32 %v1946, %v2092
    %v2152 = vmul.f32 %v1948, %v2096
    %v2153 = vmul.f32 %v1950, %v2100
    %v2154 = vmul.f32 %v1952, %v2104
    %v2155 = vmul.f32 %v1954, %v2108
    %v2156 = vmul.f32 %v1956, %v2112
    %v2157 = vmul.f32 %v1958, %v2116
    %v2158 = vmul.f32 %v1960, %v2120
    %v2159 = vmul.f32 %v1962, %v2124
    %v2160 = vmul.f32 %v1964, %v2128
    %v2161 = vmul.f32 %v1572, %v799
    %v2162 = vmul.f32 %v1574, %v800
    %v2163 = vmul.f32 %v1576, %v801
    %v2164 = vmul.f32 %v1578, %v802
    %v2165 = vmul.f32 %v1580, %v803
    %v2166 = vmul.f32 %v1582, %v804
    %v2167 = vmul.f32 %v1584, %v805
    %v2168 = vmul.f32 %v1586, %v806
    %v2169 = vmul.f32 %v1588, %v807
    %v2170 = vmul.f32 %v1590, %v808
    %v2171 = vmul.f32 %v1592, %v809
    %v2172 = vmul.f32 %v1594, %v810
    %v2173 = vmul.f32 %v1596, %v811
    %v2174 = vmul.f32 %v1598, %v812
    %v2175 = vmul.f32 %v1600, %v813
    %v2176 = vmul.f32 %v1602, %v814
    %v2177 = vadd.f32 %v2145, %v2161
    %v2178 = vadd.f32 %v2146, %v2162
    %v2179 = vadd.f32 %v2147, %v2163
    %v2180 = vadd.f32 %v2148, %v2164
    %v2181 = vadd.f32 %v2149, %v2165
    %v2182 = vadd.f32 %v2150, %v2166
    %v2183 = vadd.f32 %v2151, %v2167
    %v2184 = vadd.f32 %v2152, %v2168
    %v2185 = vadd.f32 %v2153, %v2169
    %v2186 = vadd.f32 %v2154, %v2170
    %v2187 = vadd.f32 %v2155, %v2171
    %v2188 = vadd.f32 %v2156, %v2172
    %v2189 = vadd.f32 %v2157, %v2173
    %v2190 = vadd.f32 %v2158, %v2174
    %v2191 = vadd.f32 %v2159, %v2175
    %v2192 = vadd.f32 %v2160, %v2176
    %v2193 = vpack.c.bf16 %v2178, %v2177
    %v2194 = vpack.c.bf16 %v2180, %v2179
    %v2195 = vpack.c.bf16 %v2182, %v2181
    %v2196 = vpack.c.bf16 %v2184, %v2183
    %v2197 = vpack.c.bf16 %v2186, %v2185
    %v2198 = vpack.c.bf16 %v2188, %v2187
    %v2199 = vpack.c.bf16 %v2190, %v2189
    %v2200 = vpack.c.bf16 %v2192, %v2191
    %v2201 = vld [vmem:[#allocation8] sm:$0xf]
    %v2202 = vld [vmem:[#allocation8 + $0x4] sm:$0xf]
    %v2203 = vld [vmem:[#allocation8 + $0x8] sm:$0xf]
    %v2204 = vld [vmem:[#allocation8 + $0xc] sm:$0xf]
    %v2205 = vld [vmem:[#allocation8 + $0x10] sm:$0xf]
    %v2206 = vld [vmem:[#allocation8 + $0x14] sm:$0xf]
    %v2207 = vld [vmem:[#allocation8 + $0x18] sm:$0xf]
    %v2208 = vld [vmem:[#allocation8 + $0x1c] sm:$0xf]
    %v2209 = vld [vmem:[#allocation8 + $0x20] sm:$0xf]
    %v2210 = vld [vmem:[#allocation8 + $0x24] sm:$0xf]
    %v2211 = vld [vmem:[#allocation8 + $0x28] sm:$0xf]
    %v2212 = vld [vmem:[#allocation8 + $0x2c] sm:$0xf]
    %v2213 = vld [vmem:[#allocation8 + $0x30] sm:$0xf]
    %v2214 = vld [vmem:[#allocation8 + $0x34] sm:$0xf]
    %v2215 = vld [vmem:[#allocation8 + $0x38] sm:$0xf]
    %v2216 = vld [vmem:[#allocation8 + $0x3c] sm:$0xf]
    %v2217 = vld [vmem:[%s6 + $0x2] sm:$0x1]
    %v2218 = vlaneseq
    %v2219 = vshrl.u32 %v2218, 7
    %v2220 = vsub.s32 0, %v2219
    %v2221 = vrot.slane %v2217, %v2220
    %v2238 = vunpack.c.l.b16 %v2201
    %v2239 = vunpack.c.l.b16 %v2202
    %v2240 = vunpack.c.l.b16 %v2203
    %v2241 = vunpack.c.l.b16 %v2204
    %v2242 = vunpack.c.l.b16 %v2205
    %v2243 = vunpack.c.l.b16 %v2206
    %v2244 = vunpack.c.l.b16 %v2207
    %v2245 = vunpack.c.l.b16 %v2208
    %v2246 = vunpack.c.l.b16 %v2209
    %v2247 = vunpack.c.l.b16 %v2210
    %v2248 = vunpack.c.l.b16 %v2211
    %v2249 = vunpack.c.l.b16 %v2212
    %v2250 = vunpack.c.l.b16 %v2213
    %v2251 = vunpack.c.l.b16 %v2214
    %v2252 = vunpack.c.l.b16 %v2215
    %v2253 = vunpack.c.l.b16 %v2216
    %v2254 = vpack.c.b16 %v2239, %v2238
    %v2255 = vpack.c.b16 %v2241, %v2240
    %v2256 = vpack.c.b16 %v2243, %v2242
    %v2257 = vpack.c.b16 %v2245, %v2244
    %v2258 = vpack.c.b16 %v2247, %v2246
    %v2259 = vpack.c.b16 %v2249, %v2248
    %v2260 = vpack.c.b16 %v2251, %v2250
    %v2261 = vpack.c.b16 %v2253, %v2252
    %2270 = vmatprep.subr.bf16.mxu0 0
    %2271 = vmatpush1.bf16.msra.mxu0 %v2261
    %2272 = vmatprep.subr.bf16.mxu0 0
    %2273 = vmatpush1.bf16.msra.mxu0 %v2260
    %2274 = vmatprep.subr.bf16.mxu0 0
    %2275 = vmatpush1.bf16.msra.mxu0 %v2259
    %2276 = vmatprep.subr.bf16.mxu0 0
    %2277 = vmatpush1.bf16.msra.mxu0 %v2258
    %2278 = vmatprep.subr.bf16.mxu0 0
    %2279 = vmatpush1.bf16.msra.mxu0 %v2257
    %2280 = vmatprep.subr.bf16.mxu0 0
    %2281 = vmatpush1.bf16.msra.mxu0 %v2256
    %2282 = vmatprep.subr.bf16.mxu0 0
    %2283 = vmatpush1.bf16.msra.mxu0 %v2255
    %2284 = vmatprep.subr.bf16.mxu0 0
    %2285 = vmatpush1.bf16.msra.mxu0 %v2254
    %2286 = vmatprep.subr.bf16.mxu0 0
    %2287 = vmatpush2.bf16.msra.mxu0 0
    %2288 = vmatprep.subr.bf16.mxu0 0
    %2289 = vmatpush2.bf16.msra.mxu0 0
    %2290 = vmatprep.subr.bf16.mxu0 0
    %2291 = vmatpush2.bf16.msra.mxu0 0
    %2292 = vmatprep.subr.bf16.mxu0 0
    %2293 = vmatpush2.bf16.msra.mxu0 0
    %2294 = vmatprep.subr.bf16.mxu0 0
    %2295 = vmatpush2.bf16.msra.mxu0 0
    %2296 = vmatprep.subr.bf16.mxu0 0
    %2297 = vmatpush2.bf16.msra.mxu0 0
    %2298 = vmatprep.subr.bf16.mxu0 0
    %2299 = vmatpush2.bf16.msra.mxu0 0
    %2300 = vmatprep.subr.bf16.mxu0 0
    %2301 = vmatpush2.bf16.msra.mxu0 0
    %2302 = vmatprep.mubr.bf16.mxu0 0
    %2303 = vmatmul.mubr.bf16.gmra.mxu0 %v2193
    %v2304 = vpop.f32.mrf.mxu0
    %v2305 = vadd.f32 %v2221, %v2304
    %v2306 = vpop.f32.mrf.mxu0
    %v2307 = vpop.f32.mrf.mxu0
    %v2308 = vadd.f32 %v2221, %v2307
    %v2309 = vpop.f32.mrf.mxu0
    %2310 = vmatprep.mubr.bf16.mxu0 0
    %2311 = vmatmul.mubr.bf16.gmra.mxu0 %v2194
    %v2312 = vpop.f32.mrf.mxu0
    %v2313 = vadd.f32 %v2221, %v2312
    %v2314 = vpop.f32.mrf.mxu0
    %v2315 = vpop.f32.mrf.mxu0
    %v2316 = vadd.f32 %v2221, %v2315
    %v2317 = vpop.f32.mrf.mxu0
    %2318 = vmatprep.mubr.bf16.mxu0 0
    %2319 = vmatmul.mubr.bf16.gmra.mxu0 %v2195
    %v2320 = vpop.f32.mrf.mxu0
    %v2321 = vadd.f32 %v2221, %v2320
    %v2322 = vpop.f32.mrf.mxu0
    %v2323 = vpop.f32.mrf.mxu0
    %v2324 = vadd.f32 %v2221, %v2323
    %v2325 = vpop.f32.mrf.mxu0
    %2326 = vmatprep.mubr.bf16.mxu0 0
    %2327 = vmatmul.mubr.bf16.gmra.mxu0 %v2196
    %v2328 = vpop.f32.mrf.mxu0
    %v2329 = vadd.f32 %v2221, %v2328
    %v2330 = vpop.f32.mrf.mxu0
    %v2331 = vpop.f32.mrf.mxu0
    %v2332 = vadd.f32 %v2221, %v2331
    %v2333 = vpop.f32.mrf.mxu0
    %2334 = vmatprep.mubr.bf16.mxu0 0
    %2335 = vmatmul.mubr.bf16.gmra.mxu0 %v2197
    %v2336 = vpop.f32.mrf.mxu0
    %v2337 = vadd.f32 %v2221, %v2336
    %v2338 = vpop.f32.mrf.mxu0
    %v2339 = vpop.f32.mrf.mxu0
    %v2340 = vadd.f32 %v2221, %v2339
    %v2341 = vpop.f32.mrf.mxu0
    %2342 = vmatprep.mubr.bf16.mxu0 0
    %2343 = vmatmul.mubr.bf16.gmra.mxu0 %v2198
    %v2344 = vpop.f32.mrf.mxu0
    %v2345 = vadd.f32 %v2221, %v2344
    %v2346 = vpop.f32.mrf.mxu0
    %v2347 = vpop.f32.mrf.mxu0
    %v2348 = vadd.f32 %v2221, %v2347
    %v2349 = vpop.f32.mrf.mxu0
    %2350 = vmatprep.mubr.bf16.mxu0 0
    %2351 = vmatmul.mubr.bf16.gmra.mxu0 %v2199
    %v2352 = vpop.f32.mrf.mxu0
    %v2353 = vadd.f32 %v2221, %v2352
    %v2354 = vpop.f32.mrf.mxu0
    %v2355 = vpop.f32.mrf.mxu0
    %v2356 = vadd.f32 %v2221, %v2355
    %v2357 = vpop.f32.mrf.mxu0
    %2358 = vmatprep.mubr.bf16.mxu0 0
    %2359 = vmatmul.mubr.bf16.gmra.mxu0 %v2200
    %v2360 = vpop.f32.mrf.mxu0
    %v2361 = vadd.f32 %v2221, %v2360
    %v2362 = vpop.f32.mrf.mxu0
    %v2363 = vpop.f32.mrf.mxu0
    %v2364 = vadd.f32 %v2221, %v2363
    %v2365 = vpop.f32.mrf.mxu0
    %2366 = vdwg.mxu0
    %v2367 = vld [vmem:[%s6] sm:$0x1]
    %v2368 = vld [vmem:[%s6 + $0x1] sm:$0x1]
    %2369 = vadd.xlane.f32.xlu0 %v2305
    %v2370 = vpop.xlane.xlu0 %2369
    %2371 = vadd.xlane.f32.xlu0 %v2308
    %v2372 = vpop.xlane.xlu0 %2371
    %2373 = vadd.xlane.f32.xlu0 %v2313
    %v2374 = vpop.xlane.xlu0 %2373
    %2375 = vadd.xlane.f32.xlu0 %v2316
    %v2376 = vpop.xlane.xlu0 %2375
    %2377 = vadd.xlane.f32.xlu0 %v2321
    %v2378 = vpop.xlane.xlu0 %2377
    %2379 = vadd.xlane.f32.xlu0 %v2324
    %v2380 = vpop.xlane.xlu0 %2379
    %2381 = vadd.xlane.f32.xlu0 %v2329
    %v2382 = vpop.xlane.xlu0 %2381
    %2383 = vadd.xlane.f32.xlu0 %v2332
    %v2384 = vpop.xlane.xlu0 %2383
    %2385 = vadd.xlane.f32.xlu0 %v2337
    %v2386 = vpop.xlane.xlu0 %2385
    %2387 = vadd.xlane.f32.xlu0 %v2340
    %v2388 = vpop.xlane.xlu0 %2387
    %2389 = vadd.xlane.f32.xlu0 %v2345
    %v2390 = vpop.xlane.xlu0 %2389
    %2391 = vadd.xlane.f32.xlu0 %v2348
    %v2392 = vpop.xlane.xlu0 %2391
    %2393 = vadd.xlane.f32.xlu0 %v2353
    %v2394 = vpop.xlane.xlu0 %2393
    %2395 = vadd.xlane.f32.xlu0 %v2356
    %v2396 = vpop.xlane.xlu0 %2395
    %2397 = vadd.xlane.f32.xlu0 %v2361
    %v2398 = vpop.xlane.xlu0 %2397
    %2399 = vadd.xlane.f32.xlu0 %v2364
    %v2400 = vpop.xlane.xlu0 %2399
    %v2401 = vmul.f32 %v2370, %v282
    %v2402 = vmul.f32 %v2372, %v282
    %v2403 = vmul.f32 %v2374, %v282
    %v2404 = vmul.f32 %v2376, %v282
    %v2405 = vmul.f32 %v2378, %v282
    %v2406 = vmul.f32 %v2380, %v282
    %v2407 = vmul.f32 %v2382, %v282
    %v2408 = vmul.f32 %v2384, %v282
    %v2409 = vmul.f32 %v2386, %v282
    %v2410 = vmul.f32 %v2388, %v282
    %v2411 = vmul.f32 %v2390, %v282
    %v2412 = vmul.f32 %v2392, %v282
    %v2413 = vmul.f32 %v2394, %v282
    %v2414 = vmul.f32 %v2396, %v282
    %v2415 = vmul.f32 %v2398, %v282
    %v2416 = vmul.f32 %v2400, %v282
    %v2417 = vmul.f32 %v2305, %v2305
    %v2418 = vmul.f32 %v2308, %v2308
    %v2419 = vmul.f32 %v2313, %v2313
    %v2420 = vmul.f32 %v2316, %v2316
    %v2421 = vmul.f32 %v2321, %v2321
    %v2422 = vmul.f32 %v2324, %v2324
    %v2423 = vmul.f32 %v2329, %v2329
    %v2424 = vmul.f32 %v2332, %v2332
    %v2425 = vmul.f32 %v2337, %v2337
    %v2426 = vmul.f32 %v2340, %v2340
    %v2427 = vmul.f32 %v2345, %v2345
    %v2428 = vmul.f32 %v2348, %v2348
    %v2429 = vmul.f32 %v2353, %v2353
    %v2430 = vmul.f32 %v2356, %v2356
    %v2431 = vmul.f32 %v2361, %v2361
    %v2432 = vmul.f32 %v2364, %v2364
    %2433 = vadd.xlane.f32.xlu0 %v2417
    %v2434 = vpop.xlane.xlu0 %2433
    %2435 = vadd.xlane.f32.xlu0 %v2418
    %v2436 = vpop.xlane.xlu0 %2435
    %2437 = vadd.xlane.f32.xlu0 %v2419
    %v2438 = vpop.xlane.xlu0 %2437
    %2439 = vadd.xlane.f32.xlu0 %v2420
    %v2440 = vpop.xlane.xlu0 %2439
    %2441 = vadd.xlane.f32.xlu0 %v2421
    %v2442 = vpop.xlane.xlu0 %2441
    %2443 = vadd.xlane.f32.xlu0 %v2422
    %v2444 = vpop.xlane.xlu0 %2443
    %2445 = vadd.xlane.f32.xlu0 %v2423
    %v2446 = vpop.xlane.xlu0 %2445
    %2447 = vadd.xlane.f32.xlu0 %v2424
    %v2448 = vpop.xlane.xlu0 %2447
    %2449 = vadd.xlane.f32.xlu0 %v2425
    %v2450 = vpop.xlane.xlu0 %2449
    %2451 = vadd.xlane.f32.xlu0 %v2426
    %v2452 = vpop.xlane.xlu0 %2451
    %2453 = vadd.xlane.f32.xlu0 %v2427
    %v2454 = vpop.xlane.xlu0 %2453
    %2455 = vadd.xlane.f32.xlu0 %v2428
    %v2456 = vpop.xlane.xlu0 %2455
    %2457 = vadd.xlane.f32.xlu0 %v2429
    %v2458 = vpop.xlane.xlu0 %2457
    %2459 = vadd.xlane.f32.xlu0 %v2430
    %v2460 = vpop.xlane.xlu0 %2459
    %2461 = vadd.xlane.f32.xlu0 %v2431
    %v2462 = vpop.xlane.xlu0 %2461
    %2463 = vadd.xlane.f32.xlu0 %v2432
    %v2464 = vpop.xlane.xlu0 %2463
    %v2465 = vmul.f32 %v2434, %v282
    %v2466 = vmul.f32 %v2436, %v282
    %v2467 = vmul.f32 %v2438, %v282
    %v2468 = vmul.f32 %v2440, %v282
    %v2469 = vmul.f32 %v2442, %v282
    %v2470 = vmul.f32 %v2444, %v282
    %v2471 = vmul.f32 %v2446, %v282
    %v2472 = vmul.f32 %v2448, %v282
    %v2473 = vmul.f32 %v2450, %v282
    %v2474 = vmul.f32 %v2452, %v282
    %v2475 = vmul.f32 %v2454, %v282
    %v2476 = vmul.f32 %v2456, %v282
    %v2477 = vmul.f32 %v2458, %v282
    %v2478 = vmul.f32 %v2460, %v282
    %v2479 = vmul.f32 %v2462, %v282
    %v2480 = vmul.f32 %v2464, %v282
    %v2481 = vmul.f32 %v2401, %v2401
    %v2482 = vmul.f32 %v2402, %v2402
    %v2483 = vmul.f32 %v2403, %v2403
    %v2484 = vmul.f32 %v2404, %v2404
    %v2485 = vmul.f32 %v2405, %v2405
    %v2486 = vmul.f32 %v2406, %v2406
    %v2487 = vmul.f32 %v2407, %v2407
    %v2488 = vmul.f32 %v2408, %v2408
    %v2489 = vmul.f32 %v2409, %v2409
    %v2490 = vmul.f32 %v2410, %v2410
    %v2491 = vmul.f32 %v2411, %v2411
    %v2492 = vmul.f32 %v2412, %v2412
    %v2493 = vmul.f32 %v2413, %v2413
    %v2494 = vmul.f32 %v2414, %v2414
    %v2495 = vmul.f32 %v2415, %v2415
    %v2496 = vmul.f32 %v2416, %v2416
    %v2497 = vsub.f32 %v2465, %v2481
    %v2498 = vsub.f32 %v2466, %v2482
    %v2499 = vsub.f32 %v2467, %v2483
    %v2500 = vsub.f32 %v2468, %v2484
    %v2501 = vsub.f32 %v2469, %v2485
    %v2502 = vsub.f32 %v2470, %v2486
    %v2503 = vsub.f32 %v2471, %v2487
    %v2504 = vsub.f32 %v2472, %v2488
    %v2505 = vsub.f32 %v2473, %v2489
    %v2506 = vsub.f32 %v2474, %v2490
    %v2507 = vsub.f32 %v2475, %v2491
    %v2508 = vsub.f32 %v2476, %v2492
    %v2509 = vsub.f32 %v2477, %v2493
    %v2510 = vsub.f32 %v2478, %v2494
    %v2511 = vsub.f32 %v2479, %v2495
    %v2512 = vsub.f32 %v2480, %v2496
    %v2513 = vmax.f32 %v2497, 0.0
    %v2514 = vmax.f32 %v2498, 0.0
    %v2515 = vmax.f32 %v2499, 0.0
    %v2516 = vmax.f32 %v2500, 0.0
    %v2517 = vmax.f32 %v2501, 0.0
    %v2518 = vmax.f32 %v2502, 0.0
    %v2519 = vmax.f32 %v2503, 0.0
    %v2520 = vmax.f32 %v2504, 0.0
    %v2521 = vmax.f32 %v2505, 0.0
    %v2522 = vmax.f32 %v2506, 0.0
    %v2523 = vmax.f32 %v2507, 0.0
    %v2524 = vmax.f32 %v2508, 0.0
    %v2525 = vmax.f32 %v2509, 0.0
    %v2526 = vmax.f32 %v2510, 0.0
    %v2527 = vmax.f32 %v2511, 0.0
    %v2528 = vmax.f32 %v2512, 0.0
    %v2529 = vsub.f32 %v2305, %v2401
    %v2530 = vsub.f32 %v2308, %v2402
    %v2531 = vsub.f32 %v2313, %v2403
    %v2532 = vsub.f32 %v2316, %v2404
    %v2533 = vsub.f32 %v2321, %v2405
    %v2534 = vsub.f32 %v2324, %v2406
    %v2535 = vsub.f32 %v2329, %v2407
    %v2536 = vsub.f32 %v2332, %v2408
    %v2537 = vsub.f32 %v2337, %v2409
    %v2538 = vsub.f32 %v2340, %v2410
    %v2539 = vsub.f32 %v2345, %v2411
    %v2540 = vsub.f32 %v2348, %v2412
    %v2541 = vsub.f32 %v2353, %v2413
    %v2542 = vsub.f32 %v2356, %v2414
    %v2543 = vsub.f32 %v2361, %v2415
    %v2544 = vsub.f32 %v2364, %v2416
    %v2545 = vadd.f32 %v2513, 1e-05
    %v2546 = vadd.f32 %v2514, 1e-05
    %v2547 = vadd.f32 %v2515, 1e-05
    %v2548 = vadd.f32 %v2516, 1e-05
    %v2549 = vadd.f32 %v2517, 1e-05
    %v2550 = vadd.f32 %v2518, 1e-05
    %v2551 = vadd.f32 %v2519, 1e-05
    %v2552 = vadd.f32 %v2520, 1e-05
    %v2553 = vadd.f32 %v2521, 1e-05
    %v2554 = vadd.f32 %v2522, 1e-05
    %v2555 = vadd.f32 %v2523, 1e-05
    %v2556 = vadd.f32 %v2524, 1e-05
    %v2557 = vadd.f32 %v2525, 1e-05
    %v2558 = vadd.f32 %v2526, 1e-05
    %v2559 = vadd.f32 %v2527, 1e-05
    %v2560 = vadd.f32 %v2528, 1e-05
    %v2561 = vrsqrt.pop %v2545
    %v2562 = vrsqrt.pop %v2546
    %v2563 = vrsqrt.pop %v2547
    %v2564 = vrsqrt.pop %v2548
    %v2565 = vrsqrt.pop %v2549
    %v2566 = vrsqrt.pop %v2550
    %v2567 = vrsqrt.pop %v2551
    %v2568 = vrsqrt.pop %v2552
    %v2569 = vrsqrt.pop %v2553
    %v2570 = vrsqrt.pop %v2554
    %v2571 = vrsqrt.pop %v2555
    %v2572 = vrsqrt.pop %v2556
    %v2573 = vrsqrt.pop %v2557
    %v2574 = vrsqrt.pop %v2558
    %v2575 = vrsqrt.pop %v2559
    %v2576 = vrsqrt.pop %v2560
    %v2577 = vmul.f32 %v2529, %v2561
    %v2578 = vmul.f32 %v2530, %v2562
    %v2579 = vmul.f32 %v2531, %v2563
    %v2580 = vmul.f32 %v2532, %v2564
    %v2581 = vmul.f32 %v2533, %v2565
    %v2582 = vmul.f32 %v2534, %v2566
    %v2583 = vmul.f32 %v2535, %v2567
    %v2584 = vmul.f32 %v2536, %v2568
    %v2585 = vmul.f32 %v2537, %v2569
    %v2586 = vmul.f32 %v2538, %v2570
    %v2587 = vmul.f32 %v2539, %v2571
    %v2588 = vmul.f32 %v2540, %v2572
    %v2589 = vmul.f32 %v2541, %v2573
    %v2590 = vmul.f32 %v2542, %v2574
    %v2591 = vmul.f32 %v2543, %v2575
    %v2592 = vmul.f32 %v2544, %v2576
    %v2593 = vlaneseq
    %v2594 = vshrl.u32 %v2593, 7
    %v2595 = vsub.s32 0, %v2594
    %v2596 = vrot.slane %v2367, %v2595
    %v2597 = vmul.f32 %v2577, %v2596
    %v2598 = vmul.f32 %v2578, %v2596
    %v2599 = vmul.f32 %v2579, %v2596
    %v2600 = vmul.f32 %v2580, %v2596
    %v2601 = vmul.f32 %v2581, %v2596
    %v2602 = vmul.f32 %v2582, %v2596
    %v2603 = vmul.f32 %v2583, %v2596
    %v2604 = vmul.f32 %v2584, %v2596
    %v2605 = vmul.f32 %v2585, %v2596
    %v2606 = vmul.f32 %v2586, %v2596
    %v2607 = vmul.f32 %v2587, %v2596
    %v2608 = vmul.f32 %v2588, %v2596
    %v2609 = vmul.f32 %v2589, %v2596
    %v2610 = vmul.f32 %v2590, %v2596
    %v2611 = vmul.f32 %v2591, %v2596
    %v2612 = vmul.f32 %v2592, %v2596
    %v2613 = vlaneseq
    %v2614 = vshrl.u32 %v2613, 7
    %v2615 = vsub.s32 0, %v2614
    %v2616 = vrot.slane %v2368, %v2615
    %v2617 = vadd.f32 %v2597, %v2616
    %v2618 = vadd.f32 %v2598, %v2616
    %v2619 = vadd.f32 %v2599, %v2616
    %v2620 = vadd.f32 %v2600, %v2616
    %v2621 = vadd.f32 %v2601, %v2616
    %v2622 = vadd.f32 %v2602, %v2616
    %v2623 = vadd.f32 %v2603, %v2616
    %v2624 = vadd.f32 %v2604, %v2616
    %v2625 = vadd.f32 %v2605, %v2616
    %v2626 = vadd.f32 %v2606, %v2616
    %v2627 = vadd.f32 %v2607, %v2616
    %v2628 = vadd.f32 %v2608, %v2616
    %v2629 = vadd.f32 %v2609, %v2616
    %v2630 = vadd.f32 %v2610, %v2616
    %v2631 = vadd.f32 %v2611, %v2616
    %v2632 = vadd.f32 %v2612, %v2616
    %v2633 = vmax.f32 %v2617, 0.0
    %v2634 = vmax.f32 %v2618, 0.0
    %v2635 = vmax.f32 %v2619, 0.0
    %v2636 = vmax.f32 %v2620, 0.0
    %v2637 = vmax.f32 %v2621, 0.0
    %v2638 = vmax.f32 %v2622, 0.0
    %v2639 = vmax.f32 %v2623, 0.0
    %v2640 = vmax.f32 %v2624, 0.0
    %v2641 = vmax.f32 %v2625, 0.0
    %v2642 = vmax.f32 %v2626, 0.0
    %v2643 = vmax.f32 %v2627, 0.0
    %v2644 = vmax.f32 %v2628, 0.0
    %v2645 = vmax.f32 %v2629, 0.0
    %v2646 = vmax.f32 %v2630, 0.0
    %v2647 = vmax.f32 %v2631, 0.0
    %v2648 = vmax.f32 %v2632, 0.0
    %2649 = vst [vmem:[#allocation13] sm:$0xff] %v2633
    %2650 = vst [vmem:[#allocation13 + $0x8] sm:$0xff] %v2634
    %2651 = vst [vmem:[#allocation13 + $0x10] sm:$0xff] %v2635
    %2652 = vst [vmem:[#allocation13 + $0x18] sm:$0xff] %v2636
    %2653 = vst [vmem:[#allocation13 + $0x20] sm:$0xff] %v2637
    %2654 = vst [vmem:[#allocation13 + $0x28] sm:$0xff] %v2638
    %2655 = vst [vmem:[#allocation13 + $0x30] sm:$0xff] %v2639
    %2656 = vst [vmem:[#allocation13 + $0x38] sm:$0xff] %v2640
    %2657 = vst [vmem:[#allocation13 + $0x40] sm:$0xff] %v2641
    %2658 = vst [vmem:[#allocation13 + $0x48] sm:$0xff] %v2642
    %2659 = vst [vmem:[#allocation13 + $0x50] sm:$0xff] %v2643
    %2660 = vst [vmem:[#allocation13 + $0x58] sm:$0xff] %v2644
    %2661 = vst [vmem:[#allocation13 + $0x60] sm:$0xff] %v2645
    %2662 = vst [vmem:[#allocation13 + $0x68] sm:$0xff] %v2646
    %2663 = vst [vmem:[#allocation13 + $0x70] sm:$0xff] %v2647
    %2664 = vst [vmem:[#allocation13 + $0x78] sm:$0xff] %v2648
    // Predicated region
    $region54: #{kernel_updator.1} parent=1 // pred_check
      _
    $region55: #{kernel_updator.1} parent=1 // pred_check_branch
      %2666 = sbr.rel (0) target = $region57
    $region56: #{kernel_updator.1} parent=1 // pred_region
      %s2668 = ssub.s32 2048, 2048
      %2669 = vsyncadd [#allocation4], %s2668
      %s2670 = sshll.u32 [#allocation13], 4
      %s2671 = int_to_ptr.vmem [resolvable:$true] %s2670
      %2676 = dma.vmem_to_hbm [thread:$0]  %s2671, 2048, %s7, [#allocation4], 128, 128, 8
    $region57: #{kernel_updator.1} parent=1 // pred_fallthru
      _
    // Predicated region
    $region58: #{kernel_updator.1} parent=1 // pred_check
      _
    $region59: #{kernel_updator.1} parent=1 // pred_check_branch
      %2678 = sbr.rel (0) target = $region61
    $region60: #{kernel_updator.1} parent=1 // pred_region
      %2679 = dma.done [#allocation4], 2048
    $region61: #{kernel_updator.1} parent=1 // pred_fallthru
      _
    %2680 = vsyncpa [#allocation3], 1
    %2681 = vsyncpa [#allocation6], 1
    %2682 = vsyncpa [#allocation9], 1
    %2683 = vsyncpa [#allocation12], 1
    %2684 = vsyncpa [#allocation4], 1

</llo_original>
